<compile_context>
chip_gen: v7x
topology: tpu7x:2x2x1
jax: 0.10.0
libtpu: 0.0.40
codegen_flags: <defaults>
</compile_context>

<pallas_src>
import jax
import jax.numpy as jnp
from jax.experimental import pallas as pl
from jax.experimental.pallas import tpu as pltpu


# ----------------------------------------------------------------------------
# Kernels (masked reductions over the sequence axis)
# ----------------------------------------------------------------------------
def _mean_pool_kernel(mask_ref, x_ref, out_ref, acc_ref, cnt_ref):
    """Masked mean over S, streamed S-block by S-block (f32 accumulation)."""
    s = pl.program_id(2)

    @pl.when(s == 0)
    def _init():
        acc_ref[...] = jnp.zeros_like(acc_ref)
        cnt_ref[...] = jnp.zeros_like(cnt_ref)

    m = mask_ref[...]                           # (tb, ts, 1) f32 {0, 1}
    x = x_ref[...].astype(jnp.float32)          # (tb, ts, th)
    acc_ref[...] += jnp.sum(x * m, axis=1)      # (tb, th)  VPU mul + sublane sum
    cnt_ref[...] += jnp.sum(m, axis=1)          # (tb, 1)

    @pl.when(s == pl.num_programs(2) - 1)
    def _finalize():
        cnt = jnp.maximum(cnt_ref[...], 1.0)    # avoid /0 on all-padding rows
        inv = pl.reciprocal(cnt, approx=True)   # EUP: off the VPU critical slot
        out_ref[...] = (acc_ref[...] * inv).astype(out_ref.dtype)


def _max_pool_kernel(mask_ref, x_ref, out_ref, acc_ref):
    """Masked max over S, streamed S-block by S-block (f32 accumulation)."""
    s = pl.program_id(2)

    @pl.when(s == 0)
    def _init():
        acc_ref[...] = jnp.full_like(acc_ref, -jnp.inf)

    m = mask_ref[...] > 0.0                     # (tb, ts, 1) bool
    x = x_ref[...].astype(jnp.float32)          # (tb, ts, th)
    xm = jnp.where(m, x, -jnp.inf)              # padding -> -inf (not 0)
    acc_ref[...] = jnp.maximum(acc_ref[...], jnp.max(xm, axis=1))

    @pl.when(s == pl.num_programs(2) - 1)
    def _finalize():
        out_ref[...] = acc_ref[...].astype(out_ref.dtype)


# ----------------------------------------------------------------------------
# Tiling / wrapper
# ----------------------------------------------------------------------------
_TARGET_TILE_BYTES = 1 << 20       # ~1 MiB per streamed input tile
_VMEM_LIMIT_BYTES = 48 * 1024 * 1024  # explicit budget; safe on v5e/v6e/v7x


def _pick_tiles(B, S, H, itemsize):
    """Choose (tb, ts, th) obeying the (8, 128) tiling rules."""
    # Batch tile (leading dim, no sublane/lane constraint).
    tb = 8 if (B > 8 and B % 8 == 0) else B
    # Hidden (lane) tile: keep it lane-dense (multiple of 128) and large.
    if H % 128 == 0 and H > 1024:
        th = next(t for t in (1024, 512, 256, 128) if H % t == 0)
    else:
        th = H  # full dim (always legal)
    # Sequence (sublane) tile: multiple of 8 that divides S, sized so the
    # streamed input tile is ~_TARGET_TILE_BYTES.
    if S <= 8 or S % 8 != 0:
        ts = S
    else:
        target = max(8, _TARGET_TILE_BYTES // max(1, tb * th * itemsize))
        ts = min(S, max(8, (target // 8) * 8))
        while S % ts != 0:
            ts -= 8
        ts = max(ts, 8)
    return tb, ts, th


def _masked_pool(last_hidden_state, attention_mask, strategy):
    B, S, H = last_hidden_state.shape
    itemsize = jnp.dtype(last_hidden_state.dtype).itemsize
    tb, ts, th = _pick_tiles(B, S, H, itemsize)
    grid = (B // tb, H // th, S // ts)

    # Cast the (possibly int) mask once and give it a size-1 lane dim so its
    # block shape (tb, ts, 1) satisfies the tiling rules and broadcasts along H.
    mask3 = attention_mask.astype(jnp.float32).reshape(B, S, 1)

    in_specs = [
        pl.BlockSpec((tb, ts, 1), lambda b, h, s: (b, s, 0)),   # mask (tiny)
        pl.BlockSpec((tb, ts, th), lambda b, h, s: (b, s, h)),  # hidden states
    ]
    # Same (b, h) output block for every S step -> resident accumulator,
    # single lane-dense HBM write at finalize.
    out_spec = pl.BlockSpec((tb, th), lambda b, h, s: (b, h))

    if strategy == "mean":
        kernel = _mean_pool_kernel
        scratch = [
            pltpu.VMEM((tb, th), jnp.float32),  # f32 sum accumulator
            pltpu.VMEM((tb, 1), jnp.float32),   # token count
        ]
    else:  # "max"
        kernel = _max_pool_kernel
        scratch = [pltpu.VMEM((tb, th), jnp.float32)]

    return pl.pallas_call(
        kernel,
        out_shape=jax.ShapeDtypeStruct((B, H), last_hidden_state.dtype),
        grid_spec=pltpu.PrefetchScalarGridSpec(
            num_scalar_prefetch=0,
            grid=grid,
            in_specs=in_specs,
            out_specs=out_spec,
            scratch_shapes=scratch,
        ),
        compiler_params=pltpu.CompilerParams(
            dimension_semantics=("parallel", "parallel", "arbitrary"),
            vmem_limit_bytes=_VMEM_LIMIT_BYTES,
        ),
    )(mask3, last_hidden_state)


def pooling_layer(attention_mask, last_hidden_state, strategy="mean"):
    """JAX/Pallas equivalent of PoolingLayer.forward(attention_mask, last_hidden_state)."""
    strategy = str(strategy).lower()
    if strategy == "cls":
        # Only S=0 is needed: a plain slice DMAs (B, 1, H); no streaming kernel.
        return last_hidden_state[:, 0, :]
    if strategy in ("mean", "max"):
        return _masked_pool(last_hidden_state, attention_mask, strategy)
    raise ValueError(f"Invalid pooling strategy: {strategy}")


class PoolingLayer:
    """Minimal stand-in for the PyTorch module (no learnable parameters)."""

    def __init__(self, strategy):
        strategy = str(strategy).lower()
        if strategy not in ("cls", "mean", "max"):
            raise ValueError(f"Invalid pooling strategy: {strategy}")
        self.strategy = strategy

    def __call__(self, attention_mask, last_hidden_state, **kwargs):
        return pooling_layer(attention_mask, last_hidden_state, self.strategy)


# ----------------------------------------------------------------------------
# Self-test
# ----------------------------------------------------------------------------
if __name__ == "__main__":
    key = jax.random.PRNGKey(0)
    B, S, H = 2, 1024, 512  # small enough, but S tiles into multiple blocks

    x = jax.random.normal(key, (B, S, H), dtype=jnp.float32)
    lengths = jnp.array([S, S // 3], dtype=jnp.int32)
    mask = (jnp.arange(S)[None, :] < lengths[:, None]).astype(jnp.int32)

    out_mean = jax.block_until_ready(PoolingLayer("mean")(mask, x))
    out_max = jax.block_until_ready(PoolingLayer("max")(mask, x))
    out_cls = jax.block_until_ready(PoolingLayer("cls")(mask, x))

    # Pure-jnp references.
    mf = mask.astype(jnp.float32)[:, :, None]
    ref_mean = (x * mf).sum(axis=1) / jnp.maximum(mf.sum(axis=1), 1.0)
    ref_max = jnp.where(mf > 0, x, -jnp.inf).max(axis=1)
    ref_cls = x[:, 0, :]

    assert out_mean.shape == (B, H)
    assert out_max.shape == (B, H)
    assert out_cls.shape == (B, H)
    assert jnp.allclose(out_mean, ref_mean, rtol=1e-2, atol=1e-2)  # approx recip
    assert jnp.allclose(out_max, ref_max, rtol=1e-5, atol=1e-5)
    assert jnp.allclose(out_cls, ref_cls)

    print("KERNEL_OK")
</pallas_src>

<mosaic_0001>
module attributes {stable_mosaic.version = 11 : i64} {
  func.func @_mean_pool_kernel(%arg0: i32, %arg1: i32, %arg2: i32, %arg3: memref<2x256x1xf32, #tpu.memory_space<vmem>>, %arg4: memref<2x256x512xf32, #tpu.memory_space<vmem>>, %arg5: memref<2x512xf32, #tpu.memory_space<vmem>>, %arg6: memref<2x512xf32, #tpu.memory_space<vmem>>, %arg7: memref<2x1xf32, #tpu.memory_space<vmem>>) attributes {dimension_semantics = [#tpu.dimension_semantics<parallel>, #tpu.dimension_semantics<parallel>, #tpu.dimension_semantics<arbitrary>], iteration_bounds = array<i64: 1, 1, 4>, scalar_prefetch = 0 : i64, scratch_operands = 2 : i64, tpu.core_type = #tpu.core_type<tc>, window_params = [{transform_indices = @transform_0, window_bounds = array<i64: 2, 256, 1>}, {transform_indices = @transform_1, window_bounds = array<i64: 2, 256, 512>}, {transform_indices = @transform_2, window_bounds = array<i64: 2, 512>}]} {
    %c0_i32 = arith.constant 0 : i32
    %0 = arith.cmpi eq, %arg2, %c0_i32 : i32
    %1 = arith.extui %0 : i1 to i32
    %c0_i32_0 = arith.constant 0 : i32
    %2 = arith.cmpi ne, %1, %c0_i32_0 : i32
    scf.if %2 {
      %cst_16 = arith.constant 0.000000e+00 : f32
      %18 = vector.broadcast %cst_16 : f32 to vector<2x512xf32>
      %c0_17 = arith.constant 0 : index
      %c0_18 = arith.constant 0 : index
      %19 = vector.load %arg6[%c0_17, %c0_18] : memref<2x512xf32, #tpu.memory_space<vmem>>, vector<2x512xf32>
      tpu.vector_store %arg6[%c0_17, %c0_18], %18 {strides = array<i32>} : memref<2x512xf32, #tpu.memory_space<vmem>>, vector<2x512xf32>,
      %cst_19 = arith.constant 0.000000e+00 : f32
      %20 = vector.broadcast %cst_19 : f32 to vector<2x1xf32>
      %c0_20 = arith.constant 0 : index
      %c0_21 = arith.constant 0 : index
      %21 = vector.load %arg7[%c0_20, %c0_21] : memref<2x1xf32, #tpu.memory_space<vmem>>, vector<2x1xf32>
      tpu.vector_store %arg7[%c0_20, %c0_21], %20 {strides = array<i32>} : memref<2x1xf32, #tpu.memory_space<vmem>>, vector<2x1xf32>,
    } else {
    }
    %c0 = arith.constant 0 : index
    %c0_1 = arith.constant 0 : index
    %c0_2 = arith.constant 0 : index
    %3 = vector.load %arg3[%c0, %c0_1, %c0_2] : memref<2x256x1xf32, #tpu.memory_space<vmem>>, vector<2x256x1xf32>
    %c0_3 = arith.constant 0 : index
    %c0_4 = arith.constant 0 : index
    %c0_5 = arith.constant 0 : index
    %4 = vector.load %arg4[%c0_3, %c0_4, %c0_5] : memref<2x256x512xf32, #tpu.memory_space<vmem>>, vector<2x256x512xf32>
    %c0_6 = arith.constant 0 : index
    %c0_7 = arith.constant 0 : index
    %5 = vector.load %arg6[%c0_6, %c0_7] : memref<2x512xf32, #tpu.memory_space<vmem>>, vector<2x512xf32>
    %6 = vector.broadcast %3 : vector<2x256x1xf32> to vector<2x256x512xf32>
    %7 = arith.mulf %4, %6 : vector<2x256x512xf32>
    %cst = arith.constant dense<0.000000e+00> : vector<2x512xf32>
    %8 = vector.multi_reduction <add>, %7, %cst [1] : vector<2x256x512xf32> to vector<2x512xf32>
    %9 = arith.addf %5, %8 : vector<2x512xf32>
    %c0_8 = arith.constant 0 : index
    %c0_9 = arith.constant 0 : index
    %10 = vector.load %arg6[%c0_8, %c0_9] : memref<2x512xf32, #tpu.memory_space<vmem>>, vector<2x512xf32>
    tpu.vector_store %arg6[%c0_8, %c0_9], %9 {strides = array<i32>} : memref<2x512xf32, #tpu.memory_space<vmem>>, vector<2x512xf32>,
    %c0_10 = arith.constant 0 : index
    %c0_11 = arith.constant 0 : index
    %11 = vector.load %arg7[%c0_10, %c0_11] : memref<2x1xf32, #tpu.memory_space<vmem>>, vector<2x1xf32>
    %cst_12 = arith.constant dense<0.000000e+00> : vector<2x1xf32>
    %12 = vector.multi_reduction <add>, %3, %cst_12 [1] : vector<2x256x1xf32> to vector<2x1xf32>
    %13 = arith.addf %11, %12 : vector<2x1xf32>
    %c0_13 = arith.constant 0 : index
    %c0_14 = arith.constant 0 : index
    %14 = vector.load %arg7[%c0_13, %c0_14] : memref<2x1xf32, #tpu.memory_space<vmem>>, vector<2x1xf32>
    tpu.vector_store %arg7[%c0_13, %c0_14], %13 {strides = array<i32>} : memref<2x1xf32, #tpu.memory_space<vmem>>, vector<2x1xf32>,
    %c3_i32 = arith.constant 3 : i32
    %15 = arith.cmpi eq, %arg2, %c3_i32 : i32
    %16 = arith.extui %15 : i1 to i32
    %c0_i32_15 = arith.constant 0 : i32
    %17 = arith.cmpi ne, %16, %c0_i32_15 : i32
    scf.if %17 {
      %c0_16 = arith.constant 0 : index
      %c0_17 = arith.constant 0 : index
      %18 = vector.load %arg7[%c0_16, %c0_17] : memref<2x1xf32, #tpu.memory_space<vmem>>, vector<2x1xf32>
      %cst_18 = arith.constant 1.000000e+00 : f32
      %19 = vector.broadcast %cst_18 : f32 to vector<2x1xf32>
      %20 = arith.maximumf %18, %19 : vector<2x1xf32>
      %21 = tpu.reciprocal %20 {approx = true} : vector<2x1xf32> -> vector<2x1xf32>
      %c0_19 = arith.constant 0 : index
      %c0_20 = arith.constant 0 : index
      %22 = vector.load %arg6[%c0_19, %c0_20] : memref<2x512xf32, #tpu.memory_space<vmem>>, vector<2x512xf32>
      %23 = vector.broadcast %21 : vector<2x1xf32> to vector<2x512xf32>
      %24 = arith.mulf %22, %23 : vector<2x512xf32>
      %c0_21 = arith.constant 0 : index
      %c0_22 = arith.constant 0 : index
      %25 = vector.load %arg5[%c0_21, %c0_22] : memref<2x512xf32, #tpu.memory_space<vmem>>, vector<2x512xf32>
      tpu.vector_store %arg5[%c0_21, %c0_22], %24 {strides = array<i32>} : memref<2x512xf32, #tpu.memory_space<vmem>>, vector<2x512xf32>,
    } else {
    }
    return
  }
  func.func @transform_0(%arg0: i32, %arg1: i32, %arg2: i32) -> (i32, i32, i32) {
    %c0_i32 = arith.constant 0 : i32
    %c0_i32_0 = arith.constant 0 : i32
    return %arg0, %arg2, %c0_i32 : i32, i32, i32
  }
  func.func @transform_1(%arg0: i32, %arg1: i32, %arg2: i32) -> (i32, i32, i32) {
    %c0_i32 = arith.constant 0 : i32
    return %arg0, %arg2, %arg1 : i32, i32, i32
  }
  func.func @transform_2(%arg0: i32, %arg1: i32, %arg2: i32) -> (i32, i32) {
    %c0_i32 = arith.constant 0 : i32
    return %arg0, %arg1 : i32, i32
  }
}

</mosaic_0001>

<llo_original>
// kernel: tpu_custom_call.1
$region0: #{tpu_custom_call.1}
  #allocation0 [shape = 'u32[]', space=smem, size = 0x4, offset = 0x4, fixed_abs, tag = 'smem constant byte address 0x4 - core index']
  #allocation1 [shape = 'u32[144,128]{1,0:T(1,128)}', space=vmem, size = 0x12000, scoped, tag = 'internal scratch']
  #allocation2 [shape = 'f32[2,512]{1,0:T(2,128)}', space=vmem, size = 0x1000, scoped, tag = 'scratch operand']
  #allocation3 [shape = 'f32[2,1]{1,0:T(2,128)}', space=vmem, size = 0x400, scoped, tag = 'scratch operand']
  #allocation9 [shape = 's32[]', space=sflag, size = 0x4, offset = 0, fixed_abs, tag = 'sflag constant byte address 0x0 - dummy sync flag']
  %s0 = inlined_call_operand.vmem [shape: f32[2,1024,1], index: 0, kind: input, shape index: {}]
  %s1 = inlined_call_operand.hbm [shape: f32[2,1024,512], index: 1, kind: input, shape index: {}]
  %s2 = inlined_call_operand.hbm [shape: f32[2,512], index: 2, kind: output, shape index: {}]
  %s3 = sld [smem:[#allocation0]]
  $region91: #{tpu_custom_call.1} parent=0
    _
  %s5 = ssub.s32 1, %s3
  %s6 = scalar_select 0, %s5, %s3
  $region1: #{tpu_custom_call.1} parent=0
    #allocation4 [shape = 'u8[524288]{0}', space=vmem, size = 0x80000, scoped, tag = 'input window, operand 0']
    #allocation5 [shape = 'u8[2097152]{0}', space=vmem, size = 0x200000, scoped, tag = 'input window, operand 1']
    #allocation6 [shape = 's32[2]{0}', space=sflag, size = 0x8, scoped, tag = 'scoped memory for tpu_custom_call.1']
    #allocation7 [shape = 's32[2]{0}', space=sflag, size = 0x8, scoped, tag = 'scoped memory for tpu_custom_call.1']
    #allocation8 [shape = 'u8[4096]{0}', space=vmem, size = 0x1000, scoped, tag = 'output window, operand 0, single buffered']
    %7 = vsyncpa [#allocation6], 0
    %s8 = scalar_lea.sflag [#allocation6], 1
    %9 = vsyncpa %s8, 0
    %10 = vsyncpa [#allocation7], 0
    loop: start=0, step=1, limit=6
    $region2: #{tpu_custom_call.1} parent=1 // loop_pre_header
      _
    $region3: #{tpu_custom_call.1} parent=1 // loop_header
      %s12 = sphi 0, %s16
      %p13 = scmp.ge.s32.totalorder %s12, 6
      %s19 = sphi 0, %s38
      %s20 = sphi 0, %s34
      %s21 = sphi 0, %s30
      %s22 = sphi 0, %s19
      %s23 = sphi 0, %s20
      %s24 = sphi 0, %s21
      %s25 = sphi 0, %s22
      %s26 = sphi 0, %s23
      %s27 = sphi 0, %s24
      %s43 = sphi 0, %s45
      %s46 = sphi 0, %s43
      %s47 = sphi 0, %s46
      %s63 = sphi 0, %s47
      %s73 = sphi 0, %s75
      %s76 = sphi 0, %s73
      %s77 = sphi 0, %s76
      %s93 = sphi 0, %s77
      %s101 = sphi 0, %s103
      %s104 = sphi 0, %s101
      %s105 = sphi 0, %s104
      %s121 = sphi 0, %s105
    $region4: #{tpu_custom_call.1} parent=1 // loop_header_branch
      %15 = sbr.rel (%p13) target = $region8
    $region5: #{tpu_custom_call.1} parent=1 // loop_body
      %s17 = ssub.s32 %s12, 1
      %s18 = ssub.s32 %s12, 2
      %s28 = sadd.s32 1, %s21
      %p29 = scmp.ge.s32.totalorder %s28, 4
      %s30 = scalar_select %p29, 0, %s28
      %s31 = sadd.s32 1, %s20
      %s32 = scalar_select %p29, %s31, %s20
      %p33 = scmp.ge.s32.totalorder %s32, 1
      %s34 = scalar_select %p33, 0, %s32
      %s35 = sadd.s32 1, %s19
      %s36 = scalar_select %p33, %s35, %s19
      %p37 = scmp.ge.s32.totalorder %s36, 1
      %s38 = scalar_select %p37, 0, %s36
      %s39 = ssub.s32 %s19, %s38
      %s40 = ssub.s32 %s21, %s30
      %s41 = sor.u32 %s39, %s40
      %p42 = scmp.eq.s32.totalorder %s41, 0
      %s44 = sadd.s32 %s43, 1
      %s45 = scalar_select %p42, %s43, %s44
      %p48 = pneg %p42
      %p49 = scmp.eq.s32.totalorder %s12, 3
      %p50 = por %p48, %p49
      %p51 = scmp.ne.s32.totalorder %s43, %s46
      %p52 = scmp.eq.s32.totalorder %s12, 0
      %p53 = por %p51, %p52
      %p54 = scmp.ne.s32.totalorder %s43, %s46
      %p55 = scmp.eq.s32.totalorder %s17, 3
      %p56 = por %p54, %p55
      %p57 = scmp.ne.s32.totalorder %s46, %s47
      %p58 = scmp.eq.s32.totalorder %s17, 0
      %p59 = por %p57, %p58
      %p60 = scmp.ne.s32.totalorder %s46, %s47
      %p61 = scmp.eq.s32.totalorder %s18, 3
      %p62 = por %p60, %p61
      %p64 = scmp.ne.s32.totalorder %s47, %s63
      %p65 = scmp.eq.s32.totalorder %s18, 0
      %p66 = por %p64, %p65
      %s67 = ssub.s32 %s19, %s38
      %s68 = ssub.s32 %s21, %s30
      %s69 = sor.u32 %s67, %s68
      %s70 = ssub.s32 %s20, %s34
      %s71 = sor.u32 %s69, %s70
      %p72 = scmp.eq.s32.totalorder %s71, 0
      %s74 = sadd.s32 %s73, 1
      %s75 = scalar_select %p72, %s73, %s74
      %p78 = pneg %p72
      %p79 = scmp.eq.s32.totalorder %s12, 3
      %p80 = por %p78, %p79
      %p81 = scmp.ne.s32.totalorder %s73, %s76
      %p82 = scmp.eq.s32.totalorder %s12, 0
      %p83 = por %p81, %p82
      %p84 = scmp.ne.s32.totalorder %s73, %s76
      %p85 = scmp.eq.s32.totalorder %s17, 3
      %p86 = por %p84, %p85
      %p87 = scmp.ne.s32.totalorder %s76, %s77
      %p88 = scmp.eq.s32.totalorder %s17, 0
      %p89 = por %p87, %p88
      %p90 = scmp.ne.s32.totalorder %s76, %s77
      %p91 = scmp.eq.s32.totalorder %s18, 3
      %p92 = por %p90, %p91
      %p94 = scmp.ne.s32.totalorder %s77, %s93
      %p95 = scmp.eq.s32.totalorder %s18, 0
      %p96 = por %p94, %p95
      %s97 = ssub.s32 %s19, %s38
      %s98 = ssub.s32 %s20, %s34
      %s99 = sor.u32 %s97, %s98
      %p100 = scmp.eq.s32.totalorder %s99, 0
      %s102 = sadd.s32 %s101, 1
      %s103 = scalar_select %p100, %s101, %s102
      %p106 = pneg %p100
      %p107 = scmp.eq.s32.totalorder %s12, 3
      %p108 = por %p106, %p107
      %p109 = scmp.ne.s32.totalorder %s101, %s104
      %p110 = scmp.eq.s32.totalorder %s12, 0
      %p111 = por %p109, %p110
      %p112 = scmp.ne.s32.totalorder %s101, %s104
      %p113 = scmp.eq.s32.totalorder %s17, 3
      %p114 = por %p112, %p113
      %p115 = scmp.ne.s32.totalorder %s104, %s105
      %p116 = scmp.eq.s32.totalorder %s17, 0
      %p117 = por %p115, %p116
      %p118 = scmp.ne.s32.totalorder %s104, %s105
      %p119 = scmp.eq.s32.totalorder %s18, 3
      %p120 = por %p118, %p119
      %p122 = scmp.ne.s32.totalorder %s105, %s121
      %p123 = scmp.eq.s32.totalorder %s18, 0
      %p124 = por %p122, %p123
      %p125 = scmp.le.s32.totalorder 1, %s12
      %p126 = scmp.lt.s32.totalorder %s12, 5
      %p127 = pnand %p125, %p126
      %p128 = pneg %p127
      // Predicated region
      $region9: #{tpu_custom_call.1} parent=5 // pred_check
        _
      $region10: #{tpu_custom_call.1} parent=5 // pred_check_branch
        %130 = sbr.rel (%p127) target = $region12
      $region11: #{tpu_custom_call.1} parent=5 // pred_region
        %s131 = ssub.s32 %s12, 1
      $region12: #{tpu_custom_call.1} parent=5 // pred_fallthru
        _
      %p132 = scmp.lt.s32.totalorder %s12, 4
      // Predicated region
      $region13: #{tpu_custom_call.1} parent=5 // pred_check
        %p133 = pneg %p132
      $region14: #{tpu_custom_call.1} parent=5 // pred_check_branch
        %135 = sbr.rel (%p133) target = $region16
      $region15: #{tpu_custom_call.1} parent=5 // pred_region
        // Predicated region
        $region17: #{tpu_custom_call.1} parent=15 // pred_check
          %p136 = pneg %p53
        $region18: #{tpu_custom_call.1} parent=15 // pred_check_branch
          %138 = sbr.rel (%p136) target = $region20
        $region19: #{tpu_custom_call.1} parent=15 // pred_region
          %s139 = sand.u32 %s43, 1
          %s140 = sand.u32 %s43, 1
          %s141 = smul.addr %s140, 512
          %s142 = scalar_lea.vmem [#allocation4], %s141
          %s143 = smul.u32 2, %s19
          %s144 = smul.u32 32, %s21
          %s145 = smul.addr %s143, 128
          %s146 = sadd.s32 %s144, %s145
          %s147 = smul.addr %s146, 8
          %s148 = scalar_lea.vmem %s0, %s147
          // Predicated region
          $region21: #{tpu_custom_call.1} parent=19 // pred_check
            _
          $region22: #{tpu_custom_call.1} parent=19 // pred_check_branch
            %150 = sbr.rel (0) target = $region24
          $region23: #{tpu_custom_call.1} parent=19 // pred_region
            // Predicated region
            $region25: #{tpu_custom_call.1} parent=23 // pred_check
              _
            $region26: #{tpu_custom_call.1} parent=23 // pred_check_branch
              %152 = sbr.rel (0) target = $region28
            $region27: #{tpu_custom_call.1} parent=23 // pred_region
              // Predicated region
              $region40: #{tpu_custom_call.1} parent=27 // pred_check
                _
              $region41: #{tpu_custom_call.1} parent=27 // pred_check_branch
                %293 = sbr.rel (0) target = $region43
              $region42: #{tpu_custom_call.1} parent=27 // pred_region
                loop: start=0, step=1, limit=1
                $region44: #{tpu_custom_call.1} parent=42 // loop_pre_header
                  _
                $region45: #{tpu_custom_call.1} parent=42 // loop_header
                  %s295 = sphi 0, %s299
                  %p296 = scmp.ge.s32.totalorder %s295, 1
                  %s300 = sphi %s148, %s148
                  %s301 = sphi %s142, %s142
                $region46: #{tpu_custom_call.1} parent=42 // loop_header_branch
                  %298 = sbr.rel (%p296) target = $region50
                $region47: #{tpu_custom_call.1} parent=42 // loop_body
                  %v302 = vld [vmem:[%s300] sm:$0xff]
                  %303 = vst [vmem:[%s301] sm:$0xff] %v302
                  %v304 = vld [vmem:[%s300 + $0x8] sm:$0xff]
                  %305 = vst [vmem:[%s301 + $0x8] sm:$0xff] %v304
                  %v306 = vld [vmem:[%s300 + $0x10] sm:$0xff]
                  %307 = vst [vmem:[%s301 + $0x10] sm:$0xff] %v306
                  %v308 = vld [vmem:[%s300 + $0x18] sm:$0xff]
                  %309 = vst [vmem:[%s301 + $0x18] sm:$0xff] %v308
                  %v310 = vld [vmem:[%s300 + $0x20] sm:$0xff]
                  %311 = vst [vmem:[%s301 + $0x20] sm:$0xff] %v310
                  %v312 = vld [vmem:[%s300 + $0x28] sm:$0xff]
                  %313 = vst [vmem:[%s301 + $0x28] sm:$0xff] %v312
                  %v314 = vld [vmem:[%s300 + $0x30] sm:$0xff]
                  %315 = vst [vmem:[%s301 + $0x30] sm:$0xff] %v314
                  %v316 = vld [vmem:[%s300 + $0x38] sm:$0xff]
                  %317 = vst [vmem:[%s301 + $0x38] sm:$0xff] %v316
                  %v318 = vld [vmem:[%s300 + $0x40] sm:$0xff]
                  %319 = vst [vmem:[%s301 + $0x40] sm:$0xff] %v318
                  %v320 = vld [vmem:[%s300 + $0x48] sm:$0xff]
                  %321 = vst [vmem:[%s301 + $0x48] sm:$0xff] %v320
                  %v322 = vld [vmem:[%s300 + $0x50] sm:$0xff]
                  %323 = vst [vmem:[%s301 + $0x50] sm:$0xff] %v322
                  %v324 = vld [vmem:[%s300 + $0x58] sm:$0xff]
                  %325 = vst [vmem:[%s301 + $0x58] sm:$0xff] %v324
                  %v326 = vld [vmem:[%s300 + $0x60] sm:$0xff]
                  %327 = vst [vmem:[%s301 + $0x60] sm:$0xff] %v326
                  %v328 = vld [vmem:[%s300 + $0x68] sm:$0xff]
                  %329 = vst [vmem:[%s301 + $0x68] sm:$0xff] %v328
                  %v330 = vld [vmem:[%s300 + $0x70] sm:$0xff]
                  %331 = vst [vmem:[%s301 + $0x70] sm:$0xff] %v330
                  %v332 = vld [vmem:[%s300 + $0x78] sm:$0xff]
                  %333 = vst [vmem:[%s301 + $0x78] sm:$0xff] %v332
                  %v334 = vld [vmem:[%s300 + $0x80] sm:$0xff]
                  %335 = vst [vmem:[%s301 + $0x80] sm:$0xff] %v334
                  %v336 = vld [vmem:[%s300 + $0x88] sm:$0xff]
                  %337 = vst [vmem:[%s301 + $0x88] sm:$0xff] %v336
                  %v338 = vld [vmem:[%s300 + $0x90] sm:$0xff]
                  %339 = vst [vmem:[%s301 + $0x90] sm:$0xff] %v338
                  %v340 = vld [vmem:[%s300 + $0x98] sm:$0xff]
                  %341 = vst [vmem:[%s301 + $0x98] sm:$0xff] %v340
                  %v342 = vld [vmem:[%s300 + $0xa0] sm:$0xff]
                  %343 = vst [vmem:[%s301 + $0xa0] sm:$0xff] %v342
                  %v344 = vld [vmem:[%s300 + $0xa8] sm:$0xff]
                  %345 = vst [vmem:[%s301 + $0xa8] sm:$0xff] %v344
                  %v346 = vld [vmem:[%s300 + $0xb0] sm:$0xff]
                  %347 = vst [vmem:[%s301 + $0xb0] sm:$0xff] %v346
                  %v348 = vld [vmem:[%s300 + $0xb8] sm:$0xff]
                  %349 = vst [vmem:[%s301 + $0xb8] sm:$0xff] %v348
                  %v350 = vld [vmem:[%s300 + $0xc0] sm:$0xff]
                  %351 = vst [vmem:[%s301 + $0xc0] sm:$0xff] %v350
                  %v352 = vld [vmem:[%s300 + $0xc8] sm:$0xff]
                  %353 = vst [vmem:[%s301 + $0xc8] sm:$0xff] %v352
                  %v354 = vld [vmem:[%s300 + $0xd0] sm:$0xff]
                  %355 = vst [vmem:[%s301 + $0xd0] sm:$0xff] %v354
                  %v356 = vld [vmem:[%s300 + $0xd8] sm:$0xff]
                  %357 = vst [vmem:[%s301 + $0xd8] sm:$0xff] %v356
                  %v358 = vld [vmem:[%s300 + $0xe0] sm:$0xff]
                  %359 = vst [vmem:[%s301 + $0xe0] sm:$0xff] %v358
                  %v360 = vld [vmem:[%s300 + $0xe8] sm:$0xff]
                  %361 = vst [vmem:[%s301 + $0xe8] sm:$0xff] %v360
                  %v362 = vld [vmem:[%s300 + $0xf0] sm:$0xff]
                  %363 = vst [vmem:[%s301 + $0xf0] sm:$0xff] %v362
                  %v364 = vld [vmem:[%s300 + $0xf8] sm:$0xff]
                  %365 = vst [vmem:[%s301 + $0xf8] sm:$0xff] %v364
                  %v366 = vld [vmem:[%s300 + $0x400] sm:$0xff]
                  %367 = vst [vmem:[%s301 + $0x100] sm:$0xff] %v366
                  %v368 = vld [vmem:[%s300 + $0x408] sm:$0xff]
                  %369 = vst [vmem:[%s301 + $0x108] sm:$0xff] %v368
                  %v370 = vld [vmem:[%s300 + $0x410] sm:$0xff]
                  %371 = vst [vmem:[%s301 + $0x110] sm:$0xff] %v370
                  %v372 = vld [vmem:[%s300 + $0x418] sm:$0xff]
                  %373 = vst [vmem:[%s301 + $0x118] sm:$0xff] %v372
                  %v374 = vld [vmem:[%s300 + $0x420] sm:$0xff]
                  %375 = vst [vmem:[%s301 + $0x120] sm:$0xff] %v374
                  %v376 = vld [vmem:[%s300 + $0x428] sm:$0xff]
                  %377 = vst [vmem:[%s301 + $0x128] sm:$0xff] %v376
                  %v378 = vld [vmem:[%s300 + $0x430] sm:$0xff]
                  %379 = vst [vmem:[%s301 + $0x130] sm:$0xff] %v378
                  %v380 = vld [vmem:[%s300 + $0x438] sm:$0xff]
                  %381 = vst [vmem:[%s301 + $0x138] sm:$0xff] %v380
                  %v382 = vld [vmem:[%s300 + $0x440] sm:$0xff]
                  %383 = vst [vmem:[%s301 + $0x140] sm:$0xff] %v382
                  %v384 = vld [vmem:[%s300 + $0x448] sm:$0xff]
                  %385 = vst [vmem:[%s301 + $0x148] sm:$0xff] %v384
                  %v386 = vld [vmem:[%s300 + $0x450] sm:$0xff]
                  %387 = vst [vmem:[%s301 + $0x150] sm:$0xff] %v386
                  %v388 = vld [vmem:[%s300 + $0x458] sm:$0xff]
                  %389 = vst [vmem:[%s301 + $0x158] sm:$0xff] %v388
                  %v390 = vld [vmem:[%s300 + $0x460] sm:$0xff]
                  %391 = vst [vmem:[%s301 + $0x160] sm:$0xff] %v390
                  %v392 = vld [vmem:[%s300 + $0x468] sm:$0xff]
                  %393 = vst [vmem:[%s301 + $0x168] sm:$0xff] %v392
                  %v394 = vld [vmem:[%s300 + $0x470] sm:$0xff]
                  %395 = vst [vmem:[%s301 + $0x170] sm:$0xff] %v394
                  %v396 = vld [vmem:[%s300 + $0x478] sm:$0xff]
                  %397 = vst [vmem:[%s301 + $0x178] sm:$0xff] %v396
                  %v398 = vld [vmem:[%s300 + $0x480] sm:$0xff]
                  %399 = vst [vmem:[%s301 + $0x180] sm:$0xff] %v398
                  %v400 = vld [vmem:[%s300 + $0x488] sm:$0xff]
                  %401 = vst [vmem:[%s301 + $0x188] sm:$0xff] %v400
                  %v402 = vld [vmem:[%s300 + $0x490] sm:$0xff]
                  %403 = vst [vmem:[%s301 + $0x190] sm:$0xff] %v402
                  %v404 = vld [vmem:[%s300 + $0x498] sm:$0xff]
                  %405 = vst [vmem:[%s301 + $0x198] sm:$0xff] %v404
                  %v406 = vld [vmem:[%s300 + $0x4a0] sm:$0xff]
                  %407 = vst [vmem:[%s301 + $0x1a0] sm:$0xff] %v406
                  %v408 = vld [vmem:[%s300 + $0x4a8] sm:$0xff]
                  %409 = vst [vmem:[%s301 + $0x1a8] sm:$0xff] %v408
                  %v410 = vld [vmem:[%s300 + $0x4b0] sm:$0xff]
                  %411 = vst [vmem:[%s301 + $0x1b0] sm:$0xff] %v410
                  %v412 = vld [vmem:[%s300 + $0x4b8] sm:$0xff]
                  %413 = vst [vmem:[%s301 + $0x1b8] sm:$0xff] %v412
                  %v414 = vld [vmem:[%s300 + $0x4c0] sm:$0xff]
                  %415 = vst [vmem:[%s301 + $0x1c0] sm:$0xff] %v414
                  %v416 = vld [vmem:[%s300 + $0x4c8] sm:$0xff]
                  %417 = vst [vmem:[%s301 + $0x1c8] sm:$0xff] %v416
                  %v418 = vld [vmem:[%s300 + $0x4d0] sm:$0xff]
                  %419 = vst [vmem:[%s301 + $0x1d0] sm:$0xff] %v418
                  %v420 = vld [vmem:[%s300 + $0x4d8] sm:$0xff]
                  %421 = vst [vmem:[%s301 + $0x1d8] sm:$0xff] %v420
                  %v422 = vld [vmem:[%s300 + $0x4e0] sm:$0xff]
                  %423 = vst [vmem:[%s301 + $0x1e0] sm:$0xff] %v422
                  %v424 = vld [vmem:[%s300 + $0x4e8] sm:$0xff]
                  %425 = vst [vmem:[%s301 + $0x1e8] sm:$0xff] %v424
                  %v426 = vld [vmem:[%s300 + $0x4f0] sm:$0xff]
                  %427 = vst [vmem:[%s301 + $0x1f0] sm:$0xff] %v426
                  %v428 = vld [vmem:[%s300 + $0x4f8] sm:$0xff]
                  %429 = vst [vmem:[%s301 + $0x1f8] sm:$0xff] %v428
                $region48: #{tpu_custom_call.1} parent=42 // loop_footer
                  %s299 = sadd.s32 1, %s295
                $region49: #{tpu_custom_call.1} parent=42 // loop_footer_branch
                  %294 = sbr.rel target = $region45
                $region50: #{tpu_custom_call.1} parent=42 // loop_exit
                  _
              $region43: #{tpu_custom_call.1} parent=27 // pred_fallthru
                _
              // Predicated region
              $region51: #{tpu_custom_call.1} parent=27 // pred_check
                _
              $region52: #{tpu_custom_call.1} parent=27 // pred_check_branch
                %431 = sbr.rel target = $region54
              $region53: #{tpu_custom_call.1} parent=27 // pred_region
                _
              $region54: #{tpu_custom_call.1} parent=27 // pred_fallthru
                _
            $region28: #{tpu_custom_call.1} parent=23 // pred_fallthru
              _
            // Predicated region
            $region29: #{tpu_custom_call.1} parent=23 // pred_check
              _
            $region30: #{tpu_custom_call.1} parent=23 // pred_check_branch
              %154 = sbr.rel target = $region32
            $region31: #{tpu_custom_call.1} parent=23 // pred_region
              loop: start=0, step=1, limit=1
              $region33: #{tpu_custom_call.1} parent=31 // loop_pre_header
                _
              $region34: #{tpu_custom_call.1} parent=31 // loop_header
                %s157 = sphi 0, %s161
                %p158 = scmp.ge.s32.totalorder %s157, 1
                %s162 = sphi %s148, %s148
                %s163 = sphi %s142, %s142
              $region35: #{tpu_custom_call.1} parent=31 // loop_header_branch
                %160 = sbr.rel (%p158) target = $region39
              $region36: #{tpu_custom_call.1} parent=31 // loop_body
                %v164 = vld [vmem:[%s162] sm:$0xff]
                %165 = vst [vmem:[%s163] sm:$0xff] %v164
                %v166 = vld [vmem:[%s162 + $0x8] sm:$0xff]
                %167 = vst [vmem:[%s163 + $0x8] sm:$0xff] %v166
                %v168 = vld [vmem:[%s162 + $0x10] sm:$0xff]
                %169 = vst [vmem:[%s163 + $0x10] sm:$0xff] %v168
                %v170 = vld [vmem:[%s162 + $0x18] sm:$0xff]
                %171 = vst [vmem:[%s163 + $0x18] sm:$0xff] %v170
                %v172 = vld [vmem:[%s162 + $0x20] sm:$0xff]
                %173 = vst [vmem:[%s163 + $0x20] sm:$0xff] %v172
                %v174 = vld [vmem:[%s162 + $0x28] sm:$0xff]
                %175 = vst [vmem:[%s163 + $0x28] sm:$0xff] %v174
                %v176 = vld [vmem:[%s162 + $0x30] sm:$0xff]
                %177 = vst [vmem:[%s163 + $0x30] sm:$0xff] %v176
                %v178 = vld [vmem:[%s162 + $0x38] sm:$0xff]
                %179 = vst [vmem:[%s163 + $0x38] sm:$0xff] %v178
                %v180 = vld [vmem:[%s162 + $0x40] sm:$0xff]
                %181 = vst [vmem:[%s163 + $0x40] sm:$0xff] %v180
                %v182 = vld [vmem:[%s162 + $0x48] sm:$0xff]
                %183 = vst [vmem:[%s163 + $0x48] sm:$0xff] %v182
                %v184 = vld [vmem:[%s162 + $0x50] sm:$0xff]
                %185 = vst [vmem:[%s163 + $0x50] sm:$0xff] %v184
                %v186 = vld [vmem:[%s162 + $0x58] sm:$0xff]
                %187 = vst [vmem:[%s163 + $0x58] sm:$0xff] %v186
                %v188 = vld [vmem:[%s162 + $0x60] sm:$0xff]
                %189 = vst [vmem:[%s163 + $0x60] sm:$0xff] %v188
                %v190 = vld [vmem:[%s162 + $0x68] sm:$0xff]
                %191 = vst [vmem:[%s163 + $0x68] sm:$0xff] %v190
                %v192 = vld [vmem:[%s162 + $0x70] sm:$0xff]
                %193 = vst [vmem:[%s163 + $0x70] sm:$0xff] %v192
                %v194 = vld [vmem:[%s162 + $0x78] sm:$0xff]
                %195 = vst [vmem:[%s163 + $0x78] sm:$0xff] %v194
                %v196 = vld [vmem:[%s162 + $0x80] sm:$0xff]
                %197 = vst [vmem:[%s163 + $0x80] sm:$0xff] %v196
                %v198 = vld [vmem:[%s162 + $0x88] sm:$0xff]
                %199 = vst [vmem:[%s163 + $0x88] sm:$0xff] %v198
                %v200 = vld [vmem:[%s162 + $0x90] sm:$0xff]
                %201 = vst [vmem:[%s163 + $0x90] sm:$0xff] %v200
                %v202 = vld [vmem:[%s162 + $0x98] sm:$0xff]
                %203 = vst [vmem:[%s163 + $0x98] sm:$0xff] %v202
                %v204 = vld [vmem:[%s162 + $0xa0] sm:$0xff]
                %205 = vst [vmem:[%s163 + $0xa0] sm:$0xff] %v204
                %v206 = vld [vmem:[%s162 + $0xa8] sm:$0xff]
                %207 = vst [vmem:[%s163 + $0xa8] sm:$0xff] %v206
                %v208 = vld [vmem:[%s162 + $0xb0] sm:$0xff]
                %209 = vst [vmem:[%s163 + $0xb0] sm:$0xff] %v208
                %v210 = vld [vmem:[%s162 + $0xb8] sm:$0xff]
                %211 = vst [vmem:[%s163 + $0xb8] sm:$0xff] %v210
                %v212 = vld [vmem:[%s162 + $0xc0] sm:$0xff]
                %213 = vst [vmem:[%s163 + $0xc0] sm:$0xff] %v212
                %v214 = vld [vmem:[%s162 + $0xc8] sm:$0xff]
                %215 = vst [vmem:[%s163 + $0xc8] sm:$0xff] %v214
                %v216 = vld [vmem:[%s162 + $0xd0] sm:$0xff]
                %217 = vst [vmem:[%s163 + $0xd0] sm:$0xff] %v216
                %v218 = vld [vmem:[%s162 + $0xd8] sm:$0xff]
                %219 = vst [vmem:[%s163 + $0xd8] sm:$0xff] %v218
                %v220 = vld [vmem:[%s162 + $0xe0] sm:$0xff]
                %221 = vst [vmem:[%s163 + $0xe0] sm:$0xff] %v220
                %v222 = vld [vmem:[%s162 + $0xe8] sm:$0xff]
                %223 = vst [vmem:[%s163 + $0xe8] sm:$0xff] %v222
                %v224 = vld [vmem:[%s162 + $0xf0] sm:$0xff]
                %225 = vst [vmem:[%s163 + $0xf0] sm:$0xff] %v224
                %v226 = vld [vmem:[%s162 + $0xf8] sm:$0xff]
                %227 = vst [vmem:[%s163 + $0xf8] sm:$0xff] %v226
                %v228 = vld [vmem:[%s162 + $0x400] sm:$0xff]
                %229 = vst [vmem:[%s163 + $0x100] sm:$0xff] %v228
                %v230 = vld [vmem:[%s162 + $0x408] sm:$0xff]
                %231 = vst [vmem:[%s163 + $0x108] sm:$0xff] %v230
                %v232 = vld [vmem:[%s162 + $0x410] sm:$0xff]
                %233 = vst [vmem:[%s163 + $0x110] sm:$0xff] %v232
                %v234 = vld [vmem:[%s162 + $0x418] sm:$0xff]
                %235 = vst [vmem:[%s163 + $0x118] sm:$0xff] %v234
                %v236 = vld [vmem:[%s162 + $0x420] sm:$0xff]
                %237 = vst [vmem:[%s163 + $0x120] sm:$0xff] %v236
                %v238 = vld [vmem:[%s162 + $0x428] sm:$0xff]
                %239 = vst [vmem:[%s163 + $0x128] sm:$0xff] %v238
                %v240 = vld [vmem:[%s162 + $0x430] sm:$0xff]
                %241 = vst [vmem:[%s163 + $0x130] sm:$0xff] %v240
                %v242 = vld [vmem:[%s162 + $0x438] sm:$0xff]
                %243 = vst [vmem:[%s163 + $0x138] sm:$0xff] %v242
                %v244 = vld [vmem:[%s162 + $0x440] sm:$0xff]
                %245 = vst [vmem:[%s163 + $0x140] sm:$0xff] %v244
                %v246 = vld [vmem:[%s162 + $0x448] sm:$0xff]
                %247 = vst [vmem:[%s163 + $0x148] sm:$0xff] %v246
                %v248 = vld [vmem:[%s162 + $0x450] sm:$0xff]
                %249 = vst [vmem:[%s163 + $0x150] sm:$0xff] %v248
                %v250 = vld [vmem:[%s162 + $0x458] sm:$0xff]
                %251 = vst [vmem:[%s163 + $0x158] sm:$0xff] %v250
                %v252 = vld [vmem:[%s162 + $0x460] sm:$0xff]
                %253 = vst [vmem:[%s163 + $0x160] sm:$0xff] %v252
                %v254 = vld [vmem:[%s162 + $0x468] sm:$0xff]
                %255 = vst [vmem:[%s163 + $0x168] sm:$0xff] %v254
                %v256 = vld [vmem:[%s162 + $0x470] sm:$0xff]
                %257 = vst [vmem:[%s163 + $0x170] sm:$0xff] %v256
                %v258 = vld [vmem:[%s162 + $0x478] sm:$0xff]
                %259 = vst [vmem:[%s163 + $0x178] sm:$0xff] %v258
                %v260 = vld [vmem:[%s162 + $0x480] sm:$0xff]
                %261 = vst [vmem:[%s163 + $0x180] sm:$0xff] %v260
                %v262 = vld [vmem:[%s162 + $0x488] sm:$0xff]
                %263 = vst [vmem:[%s163 + $0x188] sm:$0xff] %v262
                %v264 = vld [vmem:[%s162 + $0x490] sm:$0xff]
                %265 = vst [vmem:[%s163 + $0x190] sm:$0xff] %v264
                %v266 = vld [vmem:[%s162 + $0x498] sm:$0xff]
                %267 = vst [vmem:[%s163 + $0x198] sm:$0xff] %v266
                %v268 = vld [vmem:[%s162 + $0x4a0] sm:$0xff]
                %269 = vst [vmem:[%s163 + $0x1a0] sm:$0xff] %v268
                %v270 = vld [vmem:[%s162 + $0x4a8] sm:$0xff]
                %271 = vst [vmem:[%s163 + $0x1a8] sm:$0xff] %v270
                %v272 = vld [vmem:[%s162 + $0x4b0] sm:$0xff]
                %273 = vst [vmem:[%s163 + $0x1b0] sm:$0xff] %v272
                %v274 = vld [vmem:[%s162 + $0x4b8] sm:$0xff]
                %275 = vst [vmem:[%s163 + $0x1b8] sm:$0xff] %v274
                %v276 = vld [vmem:[%s162 + $0x4c0] sm:$0xff]
                %277 = vst [vmem:[%s163 + $0x1c0] sm:$0xff] %v276
                %v278 = vld [vmem:[%s162 + $0x4c8] sm:$0xff]
                %279 = vst [vmem:[%s163 + $0x1c8] sm:$0xff] %v278
                %v280 = vld [vmem:[%s162 + $0x4d0] sm:$0xff]
                %281 = vst [vmem:[%s163 + $0x1d0] sm:$0xff] %v280
                %v282 = vld [vmem:[%s162 + $0x4d8] sm:$0xff]
                %283 = vst [vmem:[%s163 + $0x1d8] sm:$0xff] %v282
                %v284 = vld [vmem:[%s162 + $0x4e0] sm:$0xff]
                %285 = vst [vmem:[%s163 + $0x1e0] sm:$0xff] %v284
                %v286 = vld [vmem:[%s162 + $0x4e8] sm:$0xff]
                %287 = vst [vmem:[%s163 + $0x1e8] sm:$0xff] %v286
                %v288 = vld [vmem:[%s162 + $0x4f0] sm:$0xff]
                %289 = vst [vmem:[%s163 + $0x1f0] sm:$0xff] %v288
                %v290 = vld [vmem:[%s162 + $0x4f8] sm:$0xff]
                %291 = vst [vmem:[%s163 + $0x1f8] sm:$0xff] %v290
              $region37: #{tpu_custom_call.1} parent=31 // loop_footer
                %s161 = sadd.s32 1, %s157
              $region38: #{tpu_custom_call.1} parent=31 // loop_footer_branch
                %156 = sbr.rel target = $region34
              $region39: #{tpu_custom_call.1} parent=31 // loop_exit
                _
            $region32: #{tpu_custom_call.1} parent=23 // pred_fallthru
              _
          $region24: #{tpu_custom_call.1} parent=19 // pred_fallthru
            _
          %432 = vnop
        $region20: #{tpu_custom_call.1} parent=15 // pred_fallthru
          _
        // Predicated region
        $region55: #{tpu_custom_call.1} parent=15 // pred_check
          %p433 = pneg %p83
        $region56: #{tpu_custom_call.1} parent=15 // pred_check_branch
          %435 = sbr.rel (%p433) target = $region58
        $region57: #{tpu_custom_call.1} parent=15 // pred_region
          #allocation10 [shape = 'u32[6]{0}', space=smem, size = 0x18, scoped, tag = 'DMA stride descriptor']
          %s436 = sand.u32 %s73, 1
          %s437 = scalar_lea.sflag [#allocation6], %s436
          %s438 = sand.u32 %s73, 1
          %s439 = smul.addr %s438, 2048
          %s440 = scalar_lea.vmem [#allocation5], %s439
          %s441 = smul.u32 2, %s19
          %s442 = smul.u32 32, %s21
          %s443 = smul.u32 4, %s20
          %s445 = ssub.s32 32768, 32768
          %446 = vsyncadd %s437, %s445
          %s447 = smul.addr %s442, 4
          %s448 = sadd.s32 %s443, %s447
          %s449 = smul.addr %s441, 512
          %s450 = sadd.s32 %s448, %s449
          %s451 = smul.addr %s450, 128
          %s452 = scalar_lea.hbm %s1, %s451
          %s454 = sshll.u32 1, 14
          %s455 = sxor.u32 4294967295, %s454
          %s457 = sld [smem:[#allocation0]]
          %s458 = sadd.s32 2, %s457
          %s460 = sshll.u32 7, 26
          %s461 = sxor.u32 4294967295, %s460
          %s462 = sand.u32 0, %s461
          %s463 = sshll.u32 %s458, 26
          %s464 = sor.u32 %s462, %s463
          %s465 = sshll.u32 %s440, 4
          %s466 = int_to_ptr.vmem [resolvable:$true] %s465
          %472 = sst [smem:[#allocation10]] 65536
          %s473 = scalar_lea.smem [#allocation10], 1
          %474 = sst [smem:[%s473]] 16384
          %s475 = scalar_lea.smem [#allocation10], 2
          %476 = sst [smem:[%s475]] 32
          %s477 = scalar_lea.smem [#allocation10], 3
          %478 = sst [smem:[%s477]] 512
          %s479 = scalar_lea.smem [#allocation10], 4
          %480 = sst [smem:[%s479]] 512
          %s481 = scalar_lea.smem [#allocation10], 5
          %482 = sst [smem:[%s481]] 32
          %484 = dma.general %s452, 32768, %s466, %s437, [#allocation9], [#allocation10], %s464, 0
        $region58: #{tpu_custom_call.1} parent=15 // pred_fallthru
          _
      $region16: #{tpu_custom_call.1} parent=5 // pred_fallthru
        _
      %p485 = scmp.le.s32.totalorder 1, %s12
      %p486 = scmp.lt.s32.totalorder %s12, 5
      %p487 = pnand %p485, %p486
      %p488 = pneg %p487
      // Predicated region
      $region59: #{tpu_custom_call.1} parent=5 // pred_check
        _
      $region60: #{tpu_custom_call.1} parent=5 // pred_check_branch
        %490 = sbr.rel (%p487) target = $region62
      $region61: #{tpu_custom_call.1} parent=5 // pred_region
        %s491 = ssub.s32 %s12, 1
        %s492 = sand.u32 %s46, 1
        %s493 = sand.u32 %s46, 1
        %s494 = smul.addr %s493, 512
        %s495 = scalar_lea.vmem [#allocation4], %s494
        // Predicated region
        $region63: #{tpu_custom_call.1} parent=61 // pred_check
          %p496 = pneg %p59
        $region64: #{tpu_custom_call.1} parent=61 // pred_check_branch
          %498 = sbr.rel (%p496) target = $region66
        $region65: #{tpu_custom_call.1} parent=61 // pred_region
          _
        $region66: #{tpu_custom_call.1} parent=61 // pred_fallthru
          _
        %s499 = sand.u32 %s76, 1
        %s500 = scalar_lea.sflag [#allocation6], %s499
        %s501 = sand.u32 %s76, 1
        %s502 = smul.addr %s501, 2048
        %s503 = scalar_lea.vmem [#allocation5], %s502
        // Predicated region
        $region67: #{tpu_custom_call.1} parent=61 // pred_check
          %p504 = pneg %p89
        $region68: #{tpu_custom_call.1} parent=61 // pred_check_branch
          %506 = sbr.rel (%p504) target = $region70
        $region69: #{tpu_custom_call.1} parent=61 // pred_region
          %507 = dma.done %s500, 32768
        $region70: #{tpu_custom_call.1} parent=61 // pred_fallthru
          _
        %s508 = sand.u32 %s46, 1
        %s509 = sand.u32 %s46, 1
        %s510 = smul.addr %s509, 512
        %s511 = scalar_lea.vmem [#allocation4], %s510
        %p512 = pneg %p59
        %p513 = pneg %p56
        %s514 = sand.u32 %s76, 1
        %s515 = scalar_lea.sflag [#allocation6], %s514
        %s516 = sand.u32 %s76, 1
        %s517 = smul.addr %s516, 2048
        %s518 = scalar_lea.vmem [#allocation5], %s517
        %p519 = pneg %p89
        %p520 = pneg %p86
        %p521 = pneg %p117
        %p522 = pneg %p114
        %s523 = smul.u32 2, %s22
        %s524 = smul.u32 32, %s24
        %s525 = smul.u32 2, %s22
        %s526 = smul.u32 32, %s24
        %s527 = smul.u32 4, %s23
        %s528 = smul.u32 4, %s23
        %p529 = scmp.eq.s32.totalorder %s24, 0
        // Predicated region
        $region71: #{tpu_custom_call.1} parent=61 // pred_check
          %p530 = pneg %p529
        $region72: #{tpu_custom_call.1} parent=61 // pred_check_branch
          %532 = sbr.rel (%p530) target = $region74
        $region73: #{tpu_custom_call.1} parent=61 // pred_region
          %533 = vst [vmem:[#allocation2] sm:$0xff] 0.0
          %vm534 = vcmask 1024
          %535 = vst.msk [vmem:[#allocation3] sm:$0x3] %vm534, 0.0
        $region74: #{tpu_custom_call.1} parent=61 // pred_fallthru
          _
        %v536 = vld [vmem:[%s495] sm:$0xff]
        %v537 = vld [vmem:[%s495 + $0x8] sm:$0xff]
        %v538 = vld [vmem:[%s495 + $0x10] sm:$0xff]
        %v539 = vld [vmem:[%s495 + $0x18] sm:$0xff]
        %v540 = vld [vmem:[%s495 + $0x20] sm:$0xff]
        %v541 = vld [vmem:[%s495 + $0x28] sm:$0xff]
        %v542 = vld [vmem:[%s495 + $0x30] sm:$0xff]
        %v543 = vld [vmem:[%s495 + $0x38] sm:$0xff]
        %v544 = vld [vmem:[%s495 + $0x40] sm:$0xff]
        %v545 = vld [vmem:[%s495 + $0x48] sm:$0xff]
        %v546 = vld [vmem:[%s495 + $0x50] sm:$0xff]
        %v547 = vld [vmem:[%s495 + $0x58] sm:$0xff]
        %v548 = vld [vmem:[%s495 + $0x60] sm:$0xff]
        %v549 = vld [vmem:[%s495 + $0x68] sm:$0xff]
        %v550 = vld [vmem:[%s495 + $0x70] sm:$0xff]
        %v551 = vld [vmem:[%s495 + $0x78] sm:$0xff]
        %v552 = vld [vmem:[%s495 + $0x80] sm:$0xff]
        %v553 = vld [vmem:[%s495 + $0x88] sm:$0xff]
        %v554 = vld [vmem:[%s495 + $0x90] sm:$0xff]
        %v555 = vld [vmem:[%s495 + $0x98] sm:$0xff]
        %v556 = vld [vmem:[%s495 + $0xa0] sm:$0xff]
        %v557 = vld [vmem:[%s495 + $0xa8] sm:$0xff]
        %v558 = vld [vmem:[%s495 + $0xb0] sm:$0xff]
        %v559 = vld [vmem:[%s495 + $0xb8] sm:$0xff]
        %v560 = vld [vmem:[%s495 + $0xc0] sm:$0xff]
        %v561 = vld [vmem:[%s495 + $0xc8] sm:$0xff]
        %v562 = vld [vmem:[%s495 + $0xd0] sm:$0xff]
        %v563 = vld [vmem:[%s495 + $0xd8] sm:$0xff]
        %v564 = vld [vmem:[%s495 + $0xe0] sm:$0xff]
        %v565 = vld [vmem:[%s495 + $0xe8] sm:$0xff]
        %v566 = vld [vmem:[%s495 + $0xf0] sm:$0xff]
        %v567 = vld [vmem:[%s495 + $0xf8] sm:$0xff]
        %v568 = vld [vmem:[%s495 + $0x100] sm:$0xff]
        %v569 = vld [vmem:[%s495 + $0x108] sm:$0xff]
        %v570 = vld [vmem:[%s495 + $0x110] sm:$0xff]
        %v571 = vld [vmem:[%s495 + $0x118] sm:$0xff]
        %v572 = vld [vmem:[%s495 + $0x120] sm:$0xff]
        %v573 = vld [vmem:[%s495 + $0x128] sm:$0xff]
        %v574 = vld [vmem:[%s495 + $0x130] sm:$0xff]
        %v575 = vld [vmem:[%s495 + $0x138] sm:$0xff]
        %v576 = vld [vmem:[%s495 + $0x140] sm:$0xff]
        %v577 = vld [vmem:[%s495 + $0x148] sm:$0xff]
        %v578 = vld [vmem:[%s495 + $0x150] sm:$0xff]
        %v579 = vld [vmem:[%s495 + $0x158] sm:$0xff]
        %v580 = vld [vmem:[%s495 + $0x160] sm:$0xff]
        %v581 = vld [vmem:[%s495 + $0x168] sm:$0xff]
        %v582 = vld [vmem:[%s495 + $0x170] sm:$0xff]
        %v583 = vld [vmem:[%s495 + $0x178] sm:$0xff]
        %v584 = vld [vmem:[%s495 + $0x180] sm:$0xff]
        %v585 = vld [vmem:[%s495 + $0x188] sm:$0xff]
        %v586 = vld [vmem:[%s495 + $0x190] sm:$0xff]
        %v587 = vld [vmem:[%s495 + $0x198] sm:$0xff]
        %v588 = vld [vmem:[%s495 + $0x1a0] sm:$0xff]
        %v589 = vld [vmem:[%s495 + $0x1a8] sm:$0xff]
        %v590 = vld [vmem:[%s495 + $0x1b0] sm:$0xff]
        %v591 = vld [vmem:[%s495 + $0x1b8] sm:$0xff]
        %v592 = vld [vmem:[%s495 + $0x1c0] sm:$0xff]
        %v593 = vld [vmem:[%s495 + $0x1c8] sm:$0xff]
        %v594 = vld [vmem:[%s495 + $0x1d0] sm:$0xff]
        %v595 = vld [vmem:[%s495 + $0x1d8] sm:$0xff]
        %v596 = vld [vmem:[%s495 + $0x1e0] sm:$0xff]
        %v597 = vld [vmem:[%s495 + $0x1e8] sm:$0xff]
        %v598 = vld [vmem:[%s495 + $0x1f0] sm:$0xff]
        %v599 = vld [vmem:[%s495 + $0x1f8] sm:$0xff]
        %v600 = vld [vmem:[%s503] sm:$0xff]
        %v601 = vld [vmem:[%s503 + $0x8] sm:$0xff]
        %v602 = vld [vmem:[%s503 + $0x10] sm:$0xff]
        %v603 = vld [vmem:[%s503 + $0x18] sm:$0xff]
        %v604 = vld [vmem:[%s503 + $0x20] sm:$0xff]
        %v605 = vld [vmem:[%s503 + $0x28] sm:$0xff]
        %v606 = vld [vmem:[%s503 + $0x30] sm:$0xff]
        %v607 = vld [vmem:[%s503 + $0x38] sm:$0xff]
        %v608 = vld [vmem:[%s503 + $0x40] sm:$0xff]
        %v609 = vld [vmem:[%s503 + $0x48] sm:$0xff]
        %v610 = vld [vmem:[%s503 + $0x50] sm:$0xff]
        %v611 = vld [vmem:[%s503 + $0x58] sm:$0xff]
        %v612 = vld [vmem:[%s503 + $0x60] sm:$0xff]
        %v613 = vld [vmem:[%s503 + $0x68] sm:$0xff]
        %v614 = vld [vmem:[%s503 + $0x70] sm:$0xff]
        %v615 = vld [vmem:[%s503 + $0x78] sm:$0xff]
        %v616 = vld [vmem:[%s503 + $0x80] sm:$0xff]
        %v617 = vld [vmem:[%s503 + $0x88] sm:$0xff]
        %v618 = vld [vmem:[%s503 + $0x90] sm:$0xff]
        %v619 = vld [vmem:[%s503 + $0x98] sm:$0xff]
        %v620 = vld [vmem:[%s503 + $0xa0] sm:$0xff]
        %v621 = vld [vmem:[%s503 + $0xa8] sm:$0xff]
        %v622 = vld [vmem:[%s503 + $0xb0] sm:$0xff]
        %v623 = vld [vmem:[%s503 + $0xb8] sm:$0xff]
        %v624 = vld [vmem:[%s503 + $0xc0] sm:$0xff]
        %v625 = vld [vmem:[%s503 + $0xc8] sm:$0xff]
        %v626 = vld [vmem:[%s503 + $0xd0] sm:$0xff]
        %v627 = vld [vmem:[%s503 + $0xd8] sm:$0xff]
        %v628 = vld [vmem:[%s503 + $0xe0] sm:$0xff]
        %v629 = vld [vmem:[%s503 + $0xe8] sm:$0xff]
        %v630 = vld [vmem:[%s503 + $0xf0] sm:$0xff]
        %v631 = vld [vmem:[%s503 + $0xf8] sm:$0xff]
        %v632 = vld [vmem:[%s503 + $0x100] sm:$0xff]
        %v633 = vld [vmem:[%s503 + $0x108] sm:$0xff]
        %v634 = vld [vmem:[%s503 + $0x110] sm:$0xff]
        %v635 = vld [vmem:[%s503 + $0x118] sm:$0xff]
        %v636 = vld [vmem:[%s503 + $0x120] sm:$0xff]
        %v637 = vld [vmem:[%s503 + $0x128] sm:$0xff]
        %v638 = vld [vmem:[%s503 + $0x130] sm:$0xff]
        %v639 = vld [vmem:[%s503 + $0x138] sm:$0xff]
        %v640 = vld [vmem:[%s503 + $0x140] sm:$0xff]
        %v641 = vld [vmem:[%s503 + $0x148] sm:$0xff]
        %v642 = vld [vmem:[%s503 + $0x150] sm:$0xff]
        %v643 = vld [vmem:[%s503 + $0x158] sm:$0xff]
        %v644 = vld [vmem:[%s503 + $0x160] sm:$0xff]
        %v645 = vld [vmem:[%s503 + $0x168] sm:$0xff]
        %v646 = vld [vmem:[%s503 + $0x170] sm:$0xff]
        %v647 = vld [vmem:[%s503 + $0x178] sm:$0xff]
        %v648 = vld [vmem:[%s503 + $0x180] sm:$0xff]
        %v649 = vld [vmem:[%s503 + $0x188] sm:$0xff]
        %v650 = vld [vmem:[%s503 + $0x190] sm:$0xff]
        %v651 = vld [vmem:[%s503 + $0x198] sm:$0xff]
        %v652 = vld [vmem:[%s503 + $0x1a0] sm:$0xff]
        %v653 = vld [vmem:[%s503 + $0x1a8] sm:$0xff]
        %v654 = vld [vmem:[%s503 + $0x1b0] sm:$0xff]
        %v655 = vld [vmem:[%s503 + $0x1b8] sm:$0xff]
        %v656 = vld [vmem:[%s503 + $0x1c0] sm:$0xff]
        %v657 = vld [vmem:[%s503 + $0x1c8] sm:$0xff]
        %v658 = vld [vmem:[%s503 + $0x1d0] sm:$0xff]
        %v659 = vld [vmem:[%s503 + $0x1d8] sm:$0xff]
        %v660 = vld [vmem:[%s503 + $0x1e0] sm:$0xff]
        %v661 = vld [vmem:[%s503 + $0x1e8] sm:$0xff]
        %v662 = vld [vmem:[%s503 + $0x1f0] sm:$0xff]
        %v663 = vld [vmem:[%s503 + $0x1f8] sm:$0xff]
        %v664 = vld [vmem:[%s503 + $0x200] sm:$0xff]
        %v665 = vld [vmem:[%s503 + $0x208] sm:$0xff]
        %v666 = vld [vmem:[%s503 + $0x210] sm:$0xff]
        %v667 = vld [vmem:[%s503 + $0x218] sm:$0xff]
        %v668 = vld [vmem:[%s503 + $0x220] sm:$0xff]
        %v669 = vld [vmem:[%s503 + $0x228] sm:$0xff]
        %v670 = vld [vmem:[%s503 + $0x230] sm:$0xff]
        %v671 = vld [vmem:[%s503 + $0x238] sm:$0xff]
        %v672 = vld [vmem:[%s503 + $0x240] sm:$0xff]
        %v673 = vld [vmem:[%s503 + $0x248] sm:$0xff]
        %v674 = vld [vmem:[%s503 + $0x250] sm:$0xff]
        %v675 = vld [vmem:[%s503 + $0x258] sm:$0xff]
        %v676 = vld [vmem:[%s503 + $0x260] sm:$0xff]
        %v677 = vld [vmem:[%s503 + $0x268] sm:$0xff]
        %v678 = vld [vmem:[%s503 + $0x270] sm:$0xff]
        %v679 = vld [vmem:[%s503 + $0x278] sm:$0xff]
        %v680 = vld [vmem:[%s503 + $0x280] sm:$0xff]
        %v681 = vld [vmem:[%s503 + $0x288] sm:$0xff]
        %v682 = vld [vmem:[%s503 + $0x290] sm:$0xff]
        %v683 = vld [vmem:[%s503 + $0x298] sm:$0xff]
        %v684 = vld [vmem:[%s503 + $0x2a0] sm:$0xff]
        %v685 = vld [vmem:[%s503 + $0x2a8] sm:$0xff]
        %v686 = vld [vmem:[%s503 + $0x2b0] sm:$0xff]
        %v687 = vld [vmem:[%s503 + $0x2b8] sm:$0xff]
        %v688 = vld [vmem:[%s503 + $0x2c0] sm:$0xff]
        %v689 = vld [vmem:[%s503 + $0x2c8] sm:$0xff]
        %v690 = vld [vmem:[%s503 + $0x2d0] sm:$0xff]
        %v691 = vld [vmem:[%s503 + $0x2d8] sm:$0xff]
        %v692 = vld [vmem:[%s503 + $0x2e0] sm:$0xff]
        %v693 = vld [vmem:[%s503 + $0x2e8] sm:$0xff]
        %v694 = vld [vmem:[%s503 + $0x2f0] sm:$0xff]
        %v695 = vld [vmem:[%s503 + $0x2f8] sm:$0xff]
        %v696 = vld [vmem:[%s503 + $0x300] sm:$0xff]
        %v697 = vld [vmem:[%s503 + $0x308] sm:$0xff]
        %v698 = vld [vmem:[%s503 + $0x310] sm:$0xff]
        %v699 = vld [vmem:[%s503 + $0x318] sm:$0xff]
        %v700 = vld [vmem:[%s503 + $0x320] sm:$0xff]
        %v701 = vld [vmem:[%s503 + $0x328] sm:$0xff]
        %v702 = vld [vmem:[%s503 + $0x330] sm:$0xff]
        %v703 = vld [vmem:[%s503 + $0x338] sm:$0xff]
        %v704 = vld [vmem:[%s503 + $0x340] sm:$0xff]
        %v705 = vld [vmem:[%s503 + $0x348] sm:$0xff]
        %v706 = vld [vmem:[%s503 + $0x350] sm:$0xff]
        %v707 = vld [vmem:[%s503 + $0x358] sm:$0xff]
        %v708 = vld [vmem:[%s503 + $0x360] sm:$0xff]
        %v709 = vld [vmem:[%s503 + $0x368] sm:$0xff]
        %v710 = vld [vmem:[%s503 + $0x370] sm:$0xff]
        %v711 = vld [vmem:[%s503 + $0x378] sm:$0xff]
        %v712 = vld [vmem:[%s503 + $0x380] sm:$0xff]
        %v713 = vld [vmem:[%s503 + $0x388] sm:$0xff]
        %v714 = vld [vmem:[%s503 + $0x390] sm:$0xff]
        %v715 = vld [vmem:[%s503 + $0x398] sm:$0xff]
        %v716 = vld [vmem:[%s503 + $0x3a0] sm:$0xff]
        %v717 = vld [vmem:[%s503 + $0x3a8] sm:$0xff]
        %v718 = vld [vmem:[%s503 + $0x3b0] sm:$0xff]
        %v719 = vld [vmem:[%s503 + $0x3b8] sm:$0xff]
        %v720 = vld [vmem:[%s503 + $0x3c0] sm:$0xff]
        %v721 = vld [vmem:[%s503 + $0x3c8] sm:$0xff]
        %v722 = vld [vmem:[%s503 + $0x3d0] sm:$0xff]
        %v723 = vld [vmem:[%s503 + $0x3d8] sm:$0xff]
        %v724 = vld [vmem:[%s503 + $0x3e0] sm:$0xff]
        %v725 = vld [vmem:[%s503 + $0x3e8] sm:$0xff]
        %v726 = vld [vmem:[%s503 + $0x3f0] sm:$0xff]
        %v727 = vld [vmem:[%s503 + $0x3f8] sm:$0xff]
        %v728 = vld [vmem:[%s503 + $0x400] sm:$0xff]
        %v729 = vld [vmem:[%s503 + $0x408] sm:$0xff]
        %v730 = vld [vmem:[%s503 + $0x410] sm:$0xff]
        %v731 = vld [vmem:[%s503 + $0x418] sm:$0xff]
        %v732 = vld [vmem:[%s503 + $0x420] sm:$0xff]
        %v733 = vld [vmem:[%s503 + $0x428] sm:$0xff]
        %v734 = vld [vmem:[%s503 + $0x430] sm:$0xff]
        %v735 = vld [vmem:[%s503 + $0x438] sm:$0xff]
        %v736 = vld [vmem:[%s503 + $0x440] sm:$0xff]
        %v737 = vld [vmem:[%s503 + $0x448] sm:$0xff]
        %v738 = vld [vmem:[%s503 + $0x450] sm:$0xff]
        %v739 = vld [vmem:[%s503 + $0x458] sm:$0xff]
        %v740 = vld [vmem:[%s503 + $0x460] sm:$0xff]
        %v741 = vld [vmem:[%s503 + $0x468] sm:$0xff]
        %v742 = vld [vmem:[%s503 + $0x470] sm:$0xff]
        %v743 = vld [vmem:[%s503 + $0x478] sm:$0xff]
        %v744 = vld [vmem:[%s503 + $0x480] sm:$0xff]
        %v745 = vld [vmem:[%s503 + $0x488] sm:$0xff]
        %v746 = vld [vmem:[%s503 + $0x490] sm:$0xff]
        %v747 = vld [vmem:[%s503 + $0x498] sm:$0xff]
        %v748 = vld [vmem:[%s503 + $0x4a0] sm:$0xff]
        %v749 = vld [vmem:[%s503 + $0x4a8] sm:$0xff]
        %v750 = vld [vmem:[%s503 + $0x4b0] sm:$0xff]
        %v751 = vld [vmem:[%s503 + $0x4b8] sm:$0xff]
        %v752 = vld [vmem:[%s503 + $0x4c0] sm:$0xff]
        %v753 = vld [vmem:[%s503 + $0x4c8] sm:$0xff]
        %v754 = vld [vmem:[%s503 + $0x4d0] sm:$0xff]
        %v755 = vld [vmem:[%s503 + $0x4d8] sm:$0xff]
        %v756 = vld [vmem:[%s503 + $0x4e0] sm:$0xff]
        %v757 = vld [vmem:[%s503 + $0x4e8] sm:$0xff]
        %v758 = vld [vmem:[%s503 + $0x4f0] sm:$0xff]
        %v759 = vld [vmem:[%s503 + $0x4f8] sm:$0xff]
        %v760 = vld [vmem:[%s503 + $0x500] sm:$0xff]
        %v761 = vld [vmem:[%s503 + $0x508] sm:$0xff]
        %v762 = vld [vmem:[%s503 + $0x510] sm:$0xff]
        %v763 = vld [vmem:[%s503 + $0x518] sm:$0xff]
        %v764 = vld [vmem:[%s503 + $0x520] sm:$0xff]
        %v765 = vld [vmem:[%s503 + $0x528] sm:$0xff]
        %v766 = vld [vmem:[%s503 + $0x530] sm:$0xff]
        %v767 = vld [vmem:[%s503 + $0x538] sm:$0xff]
        %v768 = vld [vmem:[%s503 + $0x540] sm:$0xff]
        %v769 = vld [vmem:[%s503 + $0x548] sm:$0xff]
        %v770 = vld [vmem:[%s503 + $0x550] sm:$0xff]
        %v771 = vld [vmem:[%s503 + $0x558] sm:$0xff]
        %v772 = vld [vmem:[%s503 + $0x560] sm:$0xff]
        %v773 = vld [vmem:[%s503 + $0x568] sm:$0xff]
        %v774 = vld [vmem:[%s503 + $0x570] sm:$0xff]
        %v775 = vld [vmem:[%s503 + $0x578] sm:$0xff]
        %v776 = vld [vmem:[%s503 + $0x580] sm:$0xff]
        %v777 = vld [vmem:[%s503 + $0x588] sm:$0xff]
        %v778 = vld [vmem:[%s503 + $0x590] sm:$0xff]
        %v779 = vld [vmem:[%s503 + $0x598] sm:$0xff]
        %v780 = vld [vmem:[%s503 + $0x5a0] sm:$0xff]
        %v781 = vld [vmem:[%s503 + $0x5a8] sm:$0xff]
        %v782 = vld [vmem:[%s503 + $0x5b0] sm:$0xff]
        %v783 = vld [vmem:[%s503 + $0x5b8] sm:$0xff]
        %v784 = vld [vmem:[%s503 + $0x5c0] sm:$0xff]
        %v785 = vld [vmem:[%s503 + $0x5c8] sm:$0xff]
        %v786 = vld [vmem:[%s503 + $0x5d0] sm:$0xff]
        %v787 = vld [vmem:[%s503 + $0x5d8] sm:$0xff]
        %v788 = vld [vmem:[%s503 + $0x5e0] sm:$0xff]
        %v789 = vld [vmem:[%s503 + $0x5e8] sm:$0xff]
        %v790 = vld [vmem:[%s503 + $0x5f0] sm:$0xff]
        %v791 = vld [vmem:[%s503 + $0x5f8] sm:$0xff]
        %v792 = vld [vmem:[%s503 + $0x600] sm:$0xff]
        %v793 = vld [vmem:[%s503 + $0x608] sm:$0xff]
        %v794 = vld [vmem:[%s503 + $0x610] sm:$0xff]
        %v795 = vld [vmem:[%s503 + $0x618] sm:$0xff]
        %v796 = vld [vmem:[%s503 + $0x620] sm:$0xff]
        %v797 = vld [vmem:[%s503 + $0x628] sm:$0xff]
        %v798 = vld [vmem:[%s503 + $0x630] sm:$0xff]
        %v799 = vld [vmem:[%s503 + $0x638] sm:$0xff]
        %v800 = vld [vmem:[%s503 + $0x640] sm:$0xff]
        %v801 = vld [vmem:[%s503 + $0x648] sm:$0xff]
        %v802 = vld [vmem:[%s503 + $0x650] sm:$0xff]
        %v803 = vld [vmem:[%s503 + $0x658] sm:$0xff]
        %v804 = vld [vmem:[%s503 + $0x660] sm:$0xff]
        %v805 = vld [vmem:[%s503 + $0x668] sm:$0xff]
        %v806 = vld [vmem:[%s503 + $0x670] sm:$0xff]
        %v807 = vld [vmem:[%s503 + $0x678] sm:$0xff]
        %v808 = vld [vmem:[%s503 + $0x680] sm:$0xff]
        %v809 = vld [vmem:[%s503 + $0x688] sm:$0xff]
        %v810 = vld [vmem:[%s503 + $0x690] sm:$0xff]
        %v811 = vld [vmem:[%s503 + $0x698] sm:$0xff]
        %v812 = vld [vmem:[%s503 + $0x6a0] sm:$0xff]
        %v813 = vld [vmem:[%s503 + $0x6a8] sm:$0xff]
        %v814 = vld [vmem:[%s503 + $0x6b0] sm:$0xff]
        %v815 = vld [vmem:[%s503 + $0x6b8] sm:$0xff]
        %v816 = vld [vmem:[%s503 + $0x6c0] sm:$0xff]
        %v817 = vld [vmem:[%s503 + $0x6c8] sm:$0xff]
        %v818 = vld [vmem:[%s503 + $0x6d0] sm:$0xff]
        %v819 = vld [vmem:[%s503 + $0x6d8] sm:$0xff]
        %v820 = vld [vmem:[%s503 + $0x6e0] sm:$0xff]
        %v821 = vld [vmem:[%s503 + $0x6e8] sm:$0xff]
        %v822 = vld [vmem:[%s503 + $0x6f0] sm:$0xff]
        %v823 = vld [vmem:[%s503 + $0x6f8] sm:$0xff]
        %v824 = vld [vmem:[%s503 + $0x700] sm:$0xff]
        %v825 = vld [vmem:[%s503 + $0x708] sm:$0xff]
        %v826 = vld [vmem:[%s503 + $0x710] sm:$0xff]
        %v827 = vld [vmem:[%s503 + $0x718] sm:$0xff]
        %v828 = vld [vmem:[%s503 + $0x720] sm:$0xff]
        %v829 = vld [vmem:[%s503 + $0x728] sm:$0xff]
        %v830 = vld [vmem:[%s503 + $0x730] sm:$0xff]
        %v831 = vld [vmem:[%s503 + $0x738] sm:$0xff]
        %v832 = vld [vmem:[%s503 + $0x740] sm:$0xff]
        %v833 = vld [vmem:[%s503 + $0x748] sm:$0xff]
        %v834 = vld [vmem:[%s503 + $0x750] sm:$0xff]
        %v835 = vld [vmem:[%s503 + $0x758] sm:$0xff]
        %v836 = vld [vmem:[%s503 + $0x760] sm:$0xff]
        %v837 = vld [vmem:[%s503 + $0x768] sm:$0xff]
        %v838 = vld [vmem:[%s503 + $0x770] sm:$0xff]
        %v839 = vld [vmem:[%s503 + $0x778] sm:$0xff]
        %v840 = vld [vmem:[%s503 + $0x780] sm:$0xff]
        %v841 = vld [vmem:[%s503 + $0x788] sm:$0xff]
        %v842 = vld [vmem:[%s503 + $0x790] sm:$0xff]
        %v843 = vld [vmem:[%s503 + $0x798] sm:$0xff]
        %v844 = vld [vmem:[%s503 + $0x7a0] sm:$0xff]
        %v845 = vld [vmem:[%s503 + $0x7a8] sm:$0xff]
        %v846 = vld [vmem:[%s503 + $0x7b0] sm:$0xff]
        %v847 = vld [vmem:[%s503 + $0x7b8] sm:$0xff]
        %v848 = vld [vmem:[%s503 + $0x7c0] sm:$0xff]
        %v849 = vld [vmem:[%s503 + $0x7c8] sm:$0xff]
        %v850 = vld [vmem:[%s503 + $0x7d0] sm:$0xff]
        %v851 = vld [vmem:[%s503 + $0x7d8] sm:$0xff]
        %v852 = vld [vmem:[%s503 + $0x7e0] sm:$0xff]
        %v853 = vld [vmem:[%s503 + $0x7e8] sm:$0xff]
        %v854 = vld [vmem:[%s503 + $0x7f0] sm:$0xff]
        %v855 = vld [vmem:[%s503 + $0x7f8] sm:$0xff]
        %v856 = vld [vmem:[#allocation2] sm:$0xff]
        %858 = vset.pattern.permute.xlu0 0
        %859 = vperm.xlu0 %858, %v536
        %v860 = vpop.permute.xlu0 %859
        %863 = vset.pattern.permute.xlu0 0
        %864 = vperm.xlu0 %863, %v537
        %v865 = vpop.permute.xlu0 %864
        %868 = vset.pattern.permute.xlu0 0
        %869 = vperm.xlu0 %868, %v538
        %v870 = vpop.permute.xlu0 %869
        %873 = vset.pattern.permute.xlu0 0
        %874 = vperm.xlu0 %873, %v539
        %v875 = vpop.permute.xlu0 %874
        %878 = vset.pattern.permute.xlu0 0
        %879 = vperm.xlu0 %878, %v540
        %v880 = vpop.permute.xlu0 %879
        %883 = vset.pattern.permute.xlu0 0
        %884 = vperm.xlu0 %883, %v541
        %v885 = vpop.permute.xlu0 %884
        %888 = vset.pattern.permute.xlu0 0
        %889 = vperm.xlu0 %888, %v542
        %v890 = vpop.permute.xlu0 %889
        %893 = vset.pattern.permute.xlu0 0
        %894 = vperm.xlu0 %893, %v543
        %v895 = vpop.permute.xlu0 %894
        %898 = vset.pattern.permute.xlu0 0
        %899 = vperm.xlu0 %898, %v544
        %v900 = vpop.permute.xlu0 %899
        %903 = vset.pattern.permute.xlu0 0
        %904 = vperm.xlu0 %903, %v545
        %v905 = vpop.permute.xlu0 %904
        %908 = vset.pattern.permute.xlu0 0
        %909 = vperm.xlu0 %908, %v546
        %v910 = vpop.permute.xlu0 %909
        %913 = vset.pattern.permute.xlu0 0
        %914 = vperm.xlu0 %913, %v547
        %v915 = vpop.permute.xlu0 %914
        %918 = vset.pattern.permute.xlu0 0
        %919 = vperm.xlu0 %918, %v548
        %v920 = vpop.permute.xlu0 %919
        %923 = vset.pattern.permute.xlu0 0
        %924 = vperm.xlu0 %923, %v549
        %v925 = vpop.permute.xlu0 %924
        %928 = vset.pattern.permute.xlu0 0
        %929 = vperm.xlu0 %928, %v550
        %v930 = vpop.permute.xlu0 %929
        %933 = vset.pattern.permute.xlu0 0
        %934 = vperm.xlu0 %933, %v551
        %v935 = vpop.permute.xlu0 %934
        %938 = vset.pattern.permute.xlu0 0
        %939 = vperm.xlu0 %938, %v552
        %v940 = vpop.permute.xlu0 %939
        %943 = vset.pattern.permute.xlu0 0
        %944 = vperm.xlu0 %943, %v553
        %v945 = vpop.permute.xlu0 %944
        %948 = vset.pattern.permute.xlu0 0
        %949 = vperm.xlu0 %948, %v554
        %v950 = vpop.permute.xlu0 %949
        %953 = vset.pattern.permute.xlu0 0
        %954 = vperm.xlu0 %953, %v555
        %v955 = vpop.permute.xlu0 %954
        %958 = vset.pattern.permute.xlu0 0
        %959 = vperm.xlu0 %958, %v556
        %v960 = vpop.permute.xlu0 %959
        %963 = vset.pattern.permute.xlu0 0
        %964 = vperm.xlu0 %963, %v557
        %v965 = vpop.permute.xlu0 %964
        %968 = vset.pattern.permute.xlu0 0
        %969 = vperm.xlu0 %968, %v558
        %v970 = vpop.permute.xlu0 %969
        %973 = vset.pattern.permute.xlu0 0
        %974 = vperm.xlu0 %973, %v559
        %v975 = vpop.permute.xlu0 %974
        %978 = vset.pattern.permute.xlu0 0
        %979 = vperm.xlu0 %978, %v560
        %v980 = vpop.permute.xlu0 %979
        %983 = vset.pattern.permute.xlu0 0
        %984 = vperm.xlu0 %983, %v561
        %v985 = vpop.permute.xlu0 %984
        %988 = vset.pattern.permute.xlu0 0
        %989 = vperm.xlu0 %988, %v562
        %v990 = vpop.permute.xlu0 %989
        %993 = vset.pattern.permute.xlu0 0
        %994 = vperm.xlu0 %993, %v563
        %v995 = vpop.permute.xlu0 %994
        %998 = vset.pattern.permute.xlu0 0
        %999 = vperm.xlu0 %998, %v564
        %v1000 = vpop.permute.xlu0 %999
        %1003 = vset.pattern.permute.xlu0 0
        %1004 = vperm.xlu0 %1003, %v565
        %v1005 = vpop.permute.xlu0 %1004
        %1008 = vset.pattern.permute.xlu0 0
        %1009 = vperm.xlu0 %1008, %v566
        %v1010 = vpop.permute.xlu0 %1009
        %1013 = vset.pattern.permute.xlu0 0
        %1014 = vperm.xlu0 %1013, %v567
        %v1015 = vpop.permute.xlu0 %1014
        %1018 = vset.pattern.permute.xlu0 0
        %1019 = vperm.xlu0 %1018, %v568
        %v1020 = vpop.permute.xlu0 %1019
        %1023 = vset.pattern.permute.xlu0 0
        %1024 = vperm.xlu0 %1023, %v569
        %v1025 = vpop.permute.xlu0 %1024
        %1028 = vset.pattern.permute.xlu0 0
        %1029 = vperm.xlu0 %1028, %v570
        %v1030 = vpop.permute.xlu0 %1029
        %1033 = vset.pattern.permute.xlu0 0
        %1034 = vperm.xlu0 %1033, %v571
        %v1035 = vpop.permute.xlu0 %1034
        %1038 = vset.pattern.permute.xlu0 0
        %1039 = vperm.xlu0 %1038, %v572
        %v1040 = vpop.permute.xlu0 %1039
        %1043 = vset.pattern.permute.xlu0 0
        %1044 = vperm.xlu0 %1043, %v573
        %v1045 = vpop.permute.xlu0 %1044
        %1048 = vset.pattern.permute.xlu0 0
        %1049 = vperm.xlu0 %1048, %v574
        %v1050 = vpop.permute.xlu0 %1049
        %1053 = vset.pattern.permute.xlu0 0
        %1054 = vperm.xlu0 %1053, %v575
        %v1055 = vpop.permute.xlu0 %1054
        %1058 = vset.pattern.permute.xlu0 0
        %1059 = vperm.xlu0 %1058, %v576
        %v1060 = vpop.permute.xlu0 %1059
        %1063 = vset.pattern.permute.xlu0 0
        %1064 = vperm.xlu0 %1063, %v577
        %v1065 = vpop.permute.xlu0 %1064
        %1068 = vset.pattern.permute.xlu0 0
        %1069 = vperm.xlu0 %1068, %v578
        %v1070 = vpop.permute.xlu0 %1069
        %1073 = vset.pattern.permute.xlu0 0
        %1074 = vperm.xlu0 %1073, %v579
        %v1075 = vpop.permute.xlu0 %1074
        %1078 = vset.pattern.permute.xlu0 0
        %1079 = vperm.xlu0 %1078, %v580
        %v1080 = vpop.permute.xlu0 %1079
        %1083 = vset.pattern.permute.xlu0 0
        %1084 = vperm.xlu0 %1083, %v581
        %v1085 = vpop.permute.xlu0 %1084
        %1088 = vset.pattern.permute.xlu0 0
        %1089 = vperm.xlu0 %1088, %v582
        %v1090 = vpop.permute.xlu0 %1089
        %1093 = vset.pattern.permute.xlu0 0
        %1094 = vperm.xlu0 %1093, %v583
        %v1095 = vpop.permute.xlu0 %1094
        %1098 = vset.pattern.permute.xlu0 0
        %1099 = vperm.xlu0 %1098, %v584
        %v1100 = vpop.permute.xlu0 %1099
        %1103 = vset.pattern.permute.xlu0 0
        %1104 = vperm.xlu0 %1103, %v585
        %v1105 = vpop.permute.xlu0 %1104
        %1108 = vset.pattern.permute.xlu0 0
        %1109 = vperm.xlu0 %1108, %v586
        %v1110 = vpop.permute.xlu0 %1109
        %1113 = vset.pattern.permute.xlu0 0
        %1114 = vperm.xlu0 %1113, %v587
        %v1115 = vpop.permute.xlu0 %1114
        %1118 = vset.pattern.permute.xlu0 0
        %1119 = vperm.xlu0 %1118, %v588
        %v1120 = vpop.permute.xlu0 %1119
        %1123 = vset.pattern.permute.xlu0 0
        %1124 = vperm.xlu0 %1123, %v589
        %v1125 = vpop.permute.xlu0 %1124
        %1128 = vset.pattern.permute.xlu0 0
        %1129 = vperm.xlu0 %1128, %v590
        %v1130 = vpop.permute.xlu0 %1129
        %1133 = vset.pattern.permute.xlu0 0
        %1134 = vperm.xlu0 %1133, %v591
        %v1135 = vpop.permute.xlu0 %1134
        %1138 = vset.pattern.permute.xlu0 0
        %1139 = vperm.xlu0 %1138, %v592
        %v1140 = vpop.permute.xlu0 %1139
        %1143 = vset.pattern.permute.xlu0 0
        %1144 = vperm.xlu0 %1143, %v593
        %v1145 = vpop.permute.xlu0 %1144
        %1148 = vset.pattern.permute.xlu0 0
        %1149 = vperm.xlu0 %1148, %v594
        %v1150 = vpop.permute.xlu0 %1149
        %1153 = vset.pattern.permute.xlu0 0
        %1154 = vperm.xlu0 %1153, %v595
        %v1155 = vpop.permute.xlu0 %1154
        %1158 = vset.pattern.permute.xlu0 0
        %1159 = vperm.xlu0 %1158, %v596
        %v1160 = vpop.permute.xlu0 %1159
        %1163 = vset.pattern.permute.xlu0 0
        %1164 = vperm.xlu0 %1163, %v597
        %v1165 = vpop.permute.xlu0 %1164
        %1168 = vset.pattern.permute.xlu0 0
        %1169 = vperm.xlu0 %1168, %v598
        %v1170 = vpop.permute.xlu0 %1169
        %1173 = vset.pattern.permute.xlu0 0
        %1174 = vperm.xlu0 %1173, %v599
        %v1175 = vpop.permute.xlu0 %1174
        %v1177 = vmul.f32 %v600, %v860
        %v1178 = vmul.f32 %v601, %v860
        %v1179 = vmul.f32 %v602, %v860
        %v1180 = vmul.f32 %v603, %v860
        %v1181 = vmul.f32 %v604, %v865
        %v1182 = vmul.f32 %v605, %v865
        %v1183 = vmul.f32 %v606, %v865
        %v1184 = vmul.f32 %v607, %v865
        %v1185 = vmul.f32 %v608, %v870
        %v1186 = vmul.f32 %v609, %v870
        %v1187 = vmul.f32 %v610, %v870
        %v1188 = vmul.f32 %v611, %v870
        %v1189 = vmul.f32 %v612, %v875
        %v1190 = vmul.f32 %v613, %v875
        %v1191 = vmul.f32 %v614, %v875
        %v1192 = vmul.f32 %v615, %v875
        %v1193 = vmul.f32 %v616, %v880
        %v1194 = vmul.f32 %v617, %v880
        %v1195 = vmul.f32 %v618, %v880
        %v1196 = vmul.f32 %v619, %v880
        %v1197 = vmul.f32 %v620, %v885
        %v1198 = vmul.f32 %v621, %v885
        %v1199 = vmul.f32 %v622, %v885
        %v1200 = vmul.f32 %v623, %v885
        %v1201 = vmul.f32 %v624, %v890
        %v1202 = vmul.f32 %v625, %v890
        %v1203 = vmul.f32 %v626, %v890
        %v1204 = vmul.f32 %v627, %v890
        %v1205 = vmul.f32 %v628, %v895
        %v1206 = vmul.f32 %v629, %v895
        %v1207 = vmul.f32 %v630, %v895
        %v1208 = vmul.f32 %v631, %v895
        %v1209 = vmul.f32 %v632, %v900
        %v1210 = vmul.f32 %v633, %v900
        %v1211 = vmul.f32 %v634, %v900
        %v1212 = vmul.f32 %v635, %v900
        %v1213 = vmul.f32 %v636, %v905
        %v1214 = vmul.f32 %v637, %v905
        %v1215 = vmul.f32 %v638, %v905
        %v1216 = vmul.f32 %v639, %v905
        %v1217 = vmul.f32 %v640, %v910
        %v1218 = vmul.f32 %v641, %v910
        %v1219 = vmul.f32 %v642, %v910
        %v1220 = vmul.f32 %v643, %v910
        %v1221 = vmul.f32 %v644, %v915
        %v1222 = vmul.f32 %v645, %v915
        %v1223 = vmul.f32 %v646, %v915
        %v1224 = vmul.f32 %v647, %v915
        %v1225 = vmul.f32 %v648, %v920
        %v1226 = vmul.f32 %v649, %v920
        %v1227 = vmul.f32 %v650, %v920
        %v1228 = vmul.f32 %v651, %v920
        %v1229 = vmul.f32 %v652, %v925
        %v1230 = vmul.f32 %v653, %v925
        %v1231 = vmul.f32 %v654, %v925
        %v1232 = vmul.f32 %v655, %v925
        %v1233 = vmul.f32 %v656, %v930
        %v1234 = vmul.f32 %v657, %v930
        %v1235 = vmul.f32 %v658, %v930
        %v1236 = vmul.f32 %v659, %v930
        %v1237 = vmul.f32 %v660, %v935
        %v1238 = vmul.f32 %v661, %v935
        %v1239 = vmul.f32 %v662, %v935
        %v1240 = vmul.f32 %v663, %v935
        %v1241 = vmul.f32 %v664, %v940
        %v1242 = vmul.f32 %v665, %v940
        %v1243 = vmul.f32 %v666, %v940
        %v1244 = vmul.f32 %v667, %v940
        %v1245 = vmul.f32 %v668, %v945
        %v1246 = vmul.f32 %v669, %v945
        %v1247 = vmul.f32 %v670, %v945
        %v1248 = vmul.f32 %v671, %v945
        %v1249 = vmul.f32 %v672, %v950
        %v1250 = vmul.f32 %v673, %v950
        %v1251 = vmul.f32 %v674, %v950
        %v1252 = vmul.f32 %v675, %v950
        %v1253 = vmul.f32 %v676, %v955
        %v1254 = vmul.f32 %v677, %v955
        %v1255 = vmul.f32 %v678, %v955
        %v1256 = vmul.f32 %v679, %v955
        %v1257 = vmul.f32 %v680, %v960
        %v1258 = vmul.f32 %v681, %v960
        %v1259 = vmul.f32 %v682, %v960
        %v1260 = vmul.f32 %v683, %v960
        %v1261 = vmul.f32 %v684, %v965
        %v1262 = vmul.f32 %v685, %v965
        %v1263 = vmul.f32 %v686, %v965
        %v1264 = vmul.f32 %v687, %v965
        %v1265 = vmul.f32 %v688, %v970
        %v1266 = vmul.f32 %v689, %v970
        %v1267 = vmul.f32 %v690, %v970
        %v1268 = vmul.f32 %v691, %v970
        %v1269 = vmul.f32 %v692, %v975
        %v1270 = vmul.f32 %v693, %v975
        %v1271 = vmul.f32 %v694, %v975
        %v1272 = vmul.f32 %v695, %v975
        %v1273 = vmul.f32 %v696, %v980
        %v1274 = vmul.f32 %v697, %v980
        %v1275 = vmul.f32 %v698, %v980
        %v1276 = vmul.f32 %v699, %v980
        %v1277 = vmul.f32 %v700, %v985
        %v1278 = vmul.f32 %v701, %v985
        %v1279 = vmul.f32 %v702, %v985
        %v1280 = vmul.f32 %v703, %v985
        %v1281 = vmul.f32 %v704, %v990
        %v1282 = vmul.f32 %v705, %v990
        %v1283 = vmul.f32 %v706, %v990
        %v1284 = vmul.f32 %v707, %v990
        %v1285 = vmul.f32 %v708, %v995
        %v1286 = vmul.f32 %v709, %v995
        %v1287 = vmul.f32 %v710, %v995
        %v1288 = vmul.f32 %v711, %v995
        %v1289 = vmul.f32 %v712, %v1000
        %v1290 = vmul.f32 %v713, %v1000
        %v1291 = vmul.f32 %v714, %v1000
        %v1292 = vmul.f32 %v715, %v1000
        %v1293 = vmul.f32 %v716, %v1005
        %v1294 = vmul.f32 %v717, %v1005
        %v1295 = vmul.f32 %v718, %v1005
        %v1296 = vmul.f32 %v719, %v1005
        %v1297 = vmul.f32 %v720, %v1010
        %v1298 = vmul.f32 %v721, %v1010
        %v1299 = vmul.f32 %v722, %v1010
        %v1300 = vmul.f32 %v723, %v1010
        %v1301 = vmul.f32 %v724, %v1015
        %v1302 = vmul.f32 %v725, %v1015
        %v1303 = vmul.f32 %v726, %v1015
        %v1304 = vmul.f32 %v727, %v1015
        %v1305 = vmul.f32 %v728, %v1020
        %v1306 = vmul.f32 %v729, %v1020
        %v1307 = vmul.f32 %v730, %v1020
        %v1308 = vmul.f32 %v731, %v1020
        %v1309 = vmul.f32 %v732, %v1025
        %v1310 = vmul.f32 %v733, %v1025
        %v1311 = vmul.f32 %v734, %v1025
        %v1312 = vmul.f32 %v735, %v1025
        %v1313 = vmul.f32 %v736, %v1030
        %v1314 = vmul.f32 %v737, %v1030
        %v1315 = vmul.f32 %v738, %v1030
        %v1316 = vmul.f32 %v739, %v1030
        %v1317 = vmul.f32 %v740, %v1035
        %v1318 = vmul.f32 %v741, %v1035
        %v1319 = vmul.f32 %v742, %v1035
        %v1320 = vmul.f32 %v743, %v1035
        %v1321 = vmul.f32 %v744, %v1040
        %v1322 = vmul.f32 %v745, %v1040
        %v1323 = vmul.f32 %v746, %v1040
        %v1324 = vmul.f32 %v747, %v1040
        %v1325 = vmul.f32 %v748, %v1045
        %v1326 = vmul.f32 %v749, %v1045
        %v1327 = vmul.f32 %v750, %v1045
        %v1328 = vmul.f32 %v751, %v1045
        %v1329 = vmul.f32 %v752, %v1050
        %v1330 = vmul.f32 %v753, %v1050
        %v1331 = vmul.f32 %v754, %v1050
        %v1332 = vmul.f32 %v755, %v1050
        %v1333 = vmul.f32 %v756, %v1055
        %v1334 = vmul.f32 %v757, %v1055
        %v1335 = vmul.f32 %v758, %v1055
        %v1336 = vmul.f32 %v759, %v1055
        %v1337 = vmul.f32 %v760, %v1060
        %v1338 = vmul.f32 %v761, %v1060
        %v1339 = vmul.f32 %v762, %v1060
        %v1340 = vmul.f32 %v763, %v1060
        %v1341 = vmul.f32 %v764, %v1065
        %v1342 = vmul.f32 %v765, %v1065
        %v1343 = vmul.f32 %v766, %v1065
        %v1344 = vmul.f32 %v767, %v1065
        %v1345 = vmul.f32 %v768, %v1070
        %v1346 = vmul.f32 %v769, %v1070
        %v1347 = vmul.f32 %v770, %v1070
        %v1348 = vmul.f32 %v771, %v1070
        %v1349 = vmul.f32 %v772, %v1075
        %v1350 = vmul.f32 %v773, %v1075
        %v1351 = vmul.f32 %v774, %v1075
        %v1352 = vmul.f32 %v775, %v1075
        %v1353 = vmul.f32 %v776, %v1080
        %v1354 = vmul.f32 %v777, %v1080
        %v1355 = vmul.f32 %v778, %v1080
        %v1356 = vmul.f32 %v779, %v1080
        %v1357 = vmul.f32 %v780, %v1085
        %v1358 = vmul.f32 %v781, %v1085
        %v1359 = vmul.f32 %v782, %v1085
        %v1360 = vmul.f32 %v783, %v1085
        %v1361 = vmul.f32 %v784, %v1090
        %v1362 = vmul.f32 %v785, %v1090
        %v1363 = vmul.f32 %v786, %v1090
        %v1364 = vmul.f32 %v787, %v1090
        %v1365 = vmul.f32 %v788, %v1095
        %v1366 = vmul.f32 %v789, %v1095
        %v1367 = vmul.f32 %v790, %v1095
        %v1368 = vmul.f32 %v791, %v1095
        %v1369 = vmul.f32 %v792, %v1100
        %v1370 = vmul.f32 %v793, %v1100
        %v1371 = vmul.f32 %v794, %v1100
        %v1372 = vmul.f32 %v795, %v1100
        %v1373 = vmul.f32 %v796, %v1105
        %v1374 = vmul.f32 %v797, %v1105
        %v1375 = vmul.f32 %v798, %v1105
        %v1376 = vmul.f32 %v799, %v1105
        %v1377 = vmul.f32 %v800, %v1110
        %v1378 = vmul.f32 %v801, %v1110
        %v1379 = vmul.f32 %v802, %v1110
        %v1380 = vmul.f32 %v803, %v1110
        %v1381 = vmul.f32 %v804, %v1115
        %v1382 = vmul.f32 %v805, %v1115
        %v1383 = vmul.f32 %v806, %v1115
        %v1384 = vmul.f32 %v807, %v1115
        %v1385 = vmul.f32 %v808, %v1120
        %v1386 = vmul.f32 %v809, %v1120
        %v1387 = vmul.f32 %v810, %v1120
        %v1388 = vmul.f32 %v811, %v1120
        %v1389 = vmul.f32 %v812, %v1125
        %v1390 = vmul.f32 %v813, %v1125
        %v1391 = vmul.f32 %v814, %v1125
        %v1392 = vmul.f32 %v815, %v1125
        %v1393 = vmul.f32 %v816, %v1130
        %v1394 = vmul.f32 %v817, %v1130
        %v1395 = vmul.f32 %v818, %v1130
        %v1396 = vmul.f32 %v819, %v1130
        %v1397 = vmul.f32 %v820, %v1135
        %v1398 = vmul.f32 %v821, %v1135
        %v1399 = vmul.f32 %v822, %v1135
        %v1400 = vmul.f32 %v823, %v1135
        %v1401 = vmul.f32 %v824, %v1140
        %v1402 = vmul.f32 %v825, %v1140
        %v1403 = vmul.f32 %v826, %v1140
        %v1404 = vmul.f32 %v827, %v1140
        %v1405 = vmul.f32 %v828, %v1145
        %v1406 = vmul.f32 %v829, %v1145
        %v1407 = vmul.f32 %v830, %v1145
        %v1408 = vmul.f32 %v831, %v1145
        %v1409 = vmul.f32 %v832, %v1150
        %v1410 = vmul.f32 %v833, %v1150
        %v1411 = vmul.f32 %v834, %v1150
        %v1412 = vmul.f32 %v835, %v1150
        %v1413 = vmul.f32 %v836, %v1155
        %v1414 = vmul.f32 %v837, %v1155
        %v1415 = vmul.f32 %v838, %v1155
        %v1416 = vmul.f32 %v839, %v1155
        %v1417 = vmul.f32 %v840, %v1160
        %v1418 = vmul.f32 %v841, %v1160
        %v1419 = vmul.f32 %v842, %v1160
        %v1420 = vmul.f32 %v843, %v1160
        %v1421 = vmul.f32 %v844, %v1165
        %v1422 = vmul.f32 %v845, %v1165
        %v1423 = vmul.f32 %v846, %v1165
        %v1424 = vmul.f32 %v847, %v1165
        %v1425 = vmul.f32 %v848, %v1170
        %v1426 = vmul.f32 %v849, %v1170
        %v1427 = vmul.f32 %v850, %v1170
        %v1428 = vmul.f32 %v851, %v1170
        %v1429 = vmul.f32 %v852, %v1175
        %v1430 = vmul.f32 %v853, %v1175
        %v1431 = vmul.f32 %v854, %v1175
        %v1432 = vmul.f32 %v855, %v1175
        %v1433 = vadd.f32 %v1177, %v1181
        %v1434 = vadd.f32 %v1433, %v1185
        %v1435 = vadd.f32 %v1434, %v1189
        %v1436 = vadd.f32 %v1435, %v1193
        %v1437 = vadd.f32 %v1436, %v1197
        %v1438 = vadd.f32 %v1437, %v1201
        %v1439 = vadd.f32 %v1438, %v1205
        %v1440 = vadd.f32 %v1439, %v1209
        %v1441 = vadd.f32 %v1440, %v1213
        %v1442 = vadd.f32 %v1441, %v1217
        %v1443 = vadd.f32 %v1442, %v1221
        %v1444 = vadd.f32 %v1443, %v1225
        %v1445 = vadd.f32 %v1444, %v1229
        %v1446 = vadd.f32 %v1445, %v1233
        %v1447 = vadd.f32 %v1446, %v1237
        %v1448 = vadd.f32 %v1447, %v1241
        %v1449 = vadd.f32 %v1448, %v1245
        %v1450 = vadd.f32 %v1449, %v1249
        %v1451 = vadd.f32 %v1450, %v1253
        %v1452 = vadd.f32 %v1451, %v1257
        %v1453 = vadd.f32 %v1452, %v1261
        %v1454 = vadd.f32 %v1453, %v1265
        %v1455 = vadd.f32 %v1454, %v1269
        %v1456 = vadd.f32 %v1455, %v1273
        %v1457 = vadd.f32 %v1456, %v1277
        %v1458 = vadd.f32 %v1457, %v1281
        %v1459 = vadd.f32 %v1458, %v1285
        %v1460 = vadd.f32 %v1459, %v1289
        %v1461 = vadd.f32 %v1460, %v1293
        %v1462 = vadd.f32 %v1461, %v1297
        %v1463 = vadd.f32 %v1462, %v1301
        %v1464 = vrot.slane %v1463, 4
        %v1465 = vadd.f32 %v1463, %v1464
        %v1466 = vrot.slane %v1465, 2
        %v1467 = vadd.f32 %v1465, %v1466
        %v1468 = vrot.slane %v1467, 1
        %v1469 = vadd.f32 %v1467, %v1468
        %v1470 = vadd.f32 %v1178, %v1182
        %v1471 = vadd.f32 %v1470, %v1186
        %v1472 = vadd.f32 %v1471, %v1190
        %v1473 = vadd.f32 %v1472, %v1194
        %v1474 = vadd.f32 %v1473, %v1198
        %v1475 = vadd.f32 %v1474, %v1202
        %v1476 = vadd.f32 %v1475, %v1206
        %v1477 = vadd.f32 %v1476, %v1210
        %v1478 = vadd.f32 %v1477, %v1214
        %v1479 = vadd.f32 %v1478, %v1218
        %v1480 = vadd.f32 %v1479, %v1222
        %v1481 = vadd.f32 %v1480, %v1226
        %v1482 = vadd.f32 %v1481, %v1230
        %v1483 = vadd.f32 %v1482, %v1234
        %v1484 = vadd.f32 %v1483, %v1238
        %v1485 = vadd.f32 %v1484, %v1242
        %v1486 = vadd.f32 %v1485, %v1246
        %v1487 = vadd.f32 %v1486, %v1250
        %v1488 = vadd.f32 %v1487, %v1254
        %v1489 = vadd.f32 %v1488, %v1258
        %v1490 = vadd.f32 %v1489, %v1262
        %v1491 = vadd.f32 %v1490, %v1266
        %v1492 = vadd.f32 %v1491, %v1270
        %v1493 = vadd.f32 %v1492, %v1274
        %v1494 = vadd.f32 %v1493, %v1278
        %v1495 = vadd.f32 %v1494, %v1282
        %v1496 = vadd.f32 %v1495, %v1286
        %v1497 = vadd.f32 %v1496, %v1290
        %v1498 = vadd.f32 %v1497, %v1294
        %v1499 = vadd.f32 %v1498, %v1298
        %v1500 = vadd.f32 %v1499, %v1302
        %v1501 = vrot.slane %v1500, 4
        %v1502 = vadd.f32 %v1500, %v1501
        %v1503 = vrot.slane %v1502, 2
        %v1504 = vadd.f32 %v1502, %v1503
        %v1505 = vrot.slane %v1504, 1
        %v1506 = vadd.f32 %v1504, %v1505
        %v1507 = vadd.f32 %v1179, %v1183
        %v1508 = vadd.f32 %v1507, %v1187
        %v1509 = vadd.f32 %v1508, %v1191
        %v1510 = vadd.f32 %v1509, %v1195
        %v1511 = vadd.f32 %v1510, %v1199
        %v1512 = vadd.f32 %v1511, %v1203
        %v1513 = vadd.f32 %v1512, %v1207
        %v1514 = vadd.f32 %v1513, %v1211
        %v1515 = vadd.f32 %v1514, %v1215
        %v1516 = vadd.f32 %v1515, %v1219
        %v1517 = vadd.f32 %v1516, %v1223
        %v1518 = vadd.f32 %v1517, %v1227
        %v1519 = vadd.f32 %v1518, %v1231
        %v1520 = vadd.f32 %v1519, %v1235
        %v1521 = vadd.f32 %v1520, %v1239
        %v1522 = vadd.f32 %v1521, %v1243
        %v1523 = vadd.f32 %v1522, %v1247
        %v1524 = vadd.f32 %v1523, %v1251
        %v1525 = vadd.f32 %v1524, %v1255
        %v1526 = vadd.f32 %v1525, %v1259
        %v1527 = vadd.f32 %v1526, %v1263
        %v1528 = vadd.f32 %v1527, %v1267
        %v1529 = vadd.f32 %v1528, %v1271
        %v1530 = vadd.f32 %v1529, %v1275
        %v1531 = vadd.f32 %v1530, %v1279
        %v1532 = vadd.f32 %v1531, %v1283
        %v1533 = vadd.f32 %v1532, %v1287
        %v1534 = vadd.f32 %v1533, %v1291
        %v1535 = vadd.f32 %v1534, %v1295
        %v1536 = vadd.f32 %v1535, %v1299
        %v1537 = vadd.f32 %v1536, %v1303
        %v1538 = vrot.slane %v1537, 4
        %v1539 = vadd.f32 %v1537, %v1538
        %v1540 = vrot.slane %v1539, 2
        %v1541 = vadd.f32 %v1539, %v1540
        %v1542 = vrot.slane %v1541, 1
        %v1543 = vadd.f32 %v1541, %v1542
        %v1544 = vadd.f32 %v1180, %v1184
        %v1545 = vadd.f32 %v1544, %v1188
        %v1546 = vadd.f32 %v1545, %v1192
        %v1547 = vadd.f32 %v1546, %v1196
        %v1548 = vadd.f32 %v1547, %v1200
        %v1549 = vadd.f32 %v1548, %v1204
        %v1550 = vadd.f32 %v1549, %v1208
        %v1551 = vadd.f32 %v1550, %v1212
        %v1552 = vadd.f32 %v1551, %v1216
        %v1553 = vadd.f32 %v1552, %v1220
        %v1554 = vadd.f32 %v1553, %v1224
        %v1555 = vadd.f32 %v1554, %v1228
        %v1556 = vadd.f32 %v1555, %v1232
        %v1557 = vadd.f32 %v1556, %v1236
        %v1558 = vadd.f32 %v1557, %v1240
        %v1559 = vadd.f32 %v1558, %v1244
        %v1560 = vadd.f32 %v1559, %v1248
        %v1561 = vadd.f32 %v1560, %v1252
        %v1562 = vadd.f32 %v1561, %v1256
        %v1563 = vadd.f32 %v1562, %v1260
        %v1564 = vadd.f32 %v1563, %v1264
        %v1565 = vadd.f32 %v1564, %v1268
        %v1566 = vadd.f32 %v1565, %v1272
        %v1567 = vadd.f32 %v1566, %v1276
        %v1568 = vadd.f32 %v1567, %v1280
        %v1569 = vadd.f32 %v1568, %v1284
        %v1570 = vadd.f32 %v1569, %v1288
        %v1571 = vadd.f32 %v1570, %v1292
        %v1572 = vadd.f32 %v1571, %v1296
        %v1573 = vadd.f32 %v1572, %v1300
        %v1574 = vadd.f32 %v1573, %v1304
        %v1575 = vrot.slane %v1574, 4
        %v1576 = vadd.f32 %v1574, %v1575
        %v1577 = vrot.slane %v1576, 2
        %v1578 = vadd.f32 %v1576, %v1577
        %v1579 = vrot.slane %v1578, 1
        %v1580 = vadd.f32 %v1578, %v1579
        %v1581 = vadd.f32 %v1305, %v1309
        %v1582 = vadd.f32 %v1581, %v1313
        %v1583 = vadd.f32 %v1582, %v1317
        %v1584 = vadd.f32 %v1583, %v1321
        %v1585 = vadd.f32 %v1584, %v1325
        %v1586 = vadd.f32 %v1585, %v1329
        %v1587 = vadd.f32 %v1586, %v1333
        %v1588 = vadd.f32 %v1587, %v1337
        %v1589 = vadd.f32 %v1588, %v1341
        %v1590 = vadd.f32 %v1589, %v1345
        %v1591 = vadd.f32 %v1590, %v1349
        %v1592 = vadd.f32 %v1591, %v1353
        %v1593 = vadd.f32 %v1592, %v1357
        %v1594 = vadd.f32 %v1593, %v1361
        %v1595 = vadd.f32 %v1594, %v1365
        %v1596 = vadd.f32 %v1595, %v1369
        %v1597 = vadd.f32 %v1596, %v1373
        %v1598 = vadd.f32 %v1597, %v1377
        %v1599 = vadd.f32 %v1598, %v1381
        %v1600 = vadd.f32 %v1599, %v1385
        %v1601 = vadd.f32 %v1600, %v1389
        %v1602 = vadd.f32 %v1601, %v1393
        %v1603 = vadd.f32 %v1602, %v1397
        %v1604 = vadd.f32 %v1603, %v1401
        %v1605 = vadd.f32 %v1604, %v1405
        %v1606 = vadd.f32 %v1605, %v1409
        %v1607 = vadd.f32 %v1606, %v1413
        %v1608 = vadd.f32 %v1607, %v1417
        %v1609 = vadd.f32 %v1608, %v1421
        %v1610 = vadd.f32 %v1609, %v1425
        %v1611 = vadd.f32 %v1610, %v1429
        %v1612 = vrot.slane %v1611, 4
        %v1613 = vadd.f32 %v1611, %v1612
        %v1614 = vrot.slane %v1613, 2
        %v1615 = vadd.f32 %v1613, %v1614
        %v1616 = vrot.slane %v1615, 1
        %v1617 = vadd.f32 %v1615, %v1616
        %v1618 = vadd.f32 %v1306, %v1310
        %v1619 = vadd.f32 %v1618, %v1314
        %v1620 = vadd.f32 %v1619, %v1318
        %v1621 = vadd.f32 %v1620, %v1322
        %v1622 = vadd.f32 %v1621, %v1326
        %v1623 = vadd.f32 %v1622, %v1330
        %v1624 = vadd.f32 %v1623, %v1334
        %v1625 = vadd.f32 %v1624, %v1338
        %v1626 = vadd.f32 %v1625, %v1342
        %v1627 = vadd.f32 %v1626, %v1346
        %v1628 = vadd.f32 %v1627, %v1350
        %v1629 = vadd.f32 %v1628, %v1354
        %v1630 = vadd.f32 %v1629, %v1358
        %v1631 = vadd.f32 %v1630, %v1362
        %v1632 = vadd.f32 %v1631, %v1366
        %v1633 = vadd.f32 %v1632, %v1370
        %v1634 = vadd.f32 %v1633, %v1374
        %v1635 = vadd.f32 %v1634, %v1378
        %v1636 = vadd.f32 %v1635, %v1382
        %v1637 = vadd.f32 %v1636, %v1386
        %v1638 = vadd.f32 %v1637, %v1390
        %v1639 = vadd.f32 %v1638, %v1394
        %v1640 = vadd.f32 %v1639, %v1398
        %v1641 = vadd.f32 %v1640, %v1402
        %v1642 = vadd.f32 %v1641, %v1406
        %v1643 = vadd.f32 %v1642, %v1410
        %v1644 = vadd.f32 %v1643, %v1414
        %v1645 = vadd.f32 %v1644, %v1418
        %v1646 = vadd.f32 %v1645, %v1422
        %v1647 = vadd.f32 %v1646, %v1426
        %v1648 = vadd.f32 %v1647, %v1430
        %v1649 = vrot.slane %v1648, 4
        %v1650 = vadd.f32 %v1648, %v1649
        %v1651 = vrot.slane %v1650, 2
        %v1652 = vadd.f32 %v1650, %v1651
        %v1653 = vrot.slane %v1652, 1
        %v1654 = vadd.f32 %v1652, %v1653
        %v1655 = vadd.f32 %v1307, %v1311
        %v1656 = vadd.f32 %v1655, %v1315
        %v1657 = vadd.f32 %v1656, %v1319
        %v1658 = vadd.f32 %v1657, %v1323
        %v1659 = vadd.f32 %v1658, %v1327
        %v1660 = vadd.f32 %v1659, %v1331
        %v1661 = vadd.f32 %v1660, %v1335
        %v1662 = vadd.f32 %v1661, %v1339
        %v1663 = vadd.f32 %v1662, %v1343
        %v1664 = vadd.f32 %v1663, %v1347
        %v1665 = vadd.f32 %v1664, %v1351
        %v1666 = vadd.f32 %v1665, %v1355
        %v1667 = vadd.f32 %v1666, %v1359
        %v1668 = vadd.f32 %v1667, %v1363
        %v1669 = vadd.f32 %v1668, %v1367
        %v1670 = vadd.f32 %v1669, %v1371
        %v1671 = vadd.f32 %v1670, %v1375
        %v1672 = vadd.f32 %v1671, %v1379
        %v1673 = vadd.f32 %v1672, %v1383
        %v1674 = vadd.f32 %v1673, %v1387
        %v1675 = vadd.f32 %v1674, %v1391
        %v1676 = vadd.f32 %v1675, %v1395
        %v1677 = vadd.f32 %v1676, %v1399
        %v1678 = vadd.f32 %v1677, %v1403
        %v1679 = vadd.f32 %v1678, %v1407
        %v1680 = vadd.f32 %v1679, %v1411
        %v1681 = vadd.f32 %v1680, %v1415
        %v1682 = vadd.f32 %v1681, %v1419
        %v1683 = vadd.f32 %v1682, %v1423
        %v1684 = vadd.f32 %v1683, %v1427
        %v1685 = vadd.f32 %v1684, %v1431
        %v1686 = vrot.slane %v1685, 4
        %v1687 = vadd.f32 %v1685, %v1686
        %v1688 = vrot.slane %v1687, 2
        %v1689 = vadd.f32 %v1687, %v1688
        %v1690 = vrot.slane %v1689, 1
        %v1691 = vadd.f32 %v1689, %v1690
        %v1692 = vadd.f32 %v1308, %v1312
        %v1693 = vadd.f32 %v1692, %v1316
        %v1694 = vadd.f32 %v1693, %v1320
        %v1695 = vadd.f32 %v1694, %v1324
        %v1696 = vadd.f32 %v1695, %v1328
        %v1697 = vadd.f32 %v1696, %v1332
        %v1698 = vadd.f32 %v1697, %v1336
        %v1699 = vadd.f32 %v1698, %v1340
        %v1700 = vadd.f32 %v1699, %v1344
        %v1701 = vadd.f32 %v1700, %v1348
        %v1702 = vadd.f32 %v1701, %v1352
        %v1703 = vadd.f32 %v1702, %v1356
        %v1704 = vadd.f32 %v1703, %v1360
        %v1705 = vadd.f32 %v1704, %v1364
        %v1706 = vadd.f32 %v1705, %v1368
        %v1707 = vadd.f32 %v1706, %v1372
        %v1708 = vadd.f32 %v1707, %v1376
        %v1709 = vadd.f32 %v1708, %v1380
        %v1710 = vadd.f32 %v1709, %v1384
        %v1711 = vadd.f32 %v1710, %v1388
        %v1712 = vadd.f32 %v1711, %v1392
        %v1713 = vadd.f32 %v1712, %v1396
        %v1714 = vadd.f32 %v1713, %v1400
        %v1715 = vadd.f32 %v1714, %v1404
        %v1716 = vadd.f32 %v1715, %v1408
        %v1717 = vadd.f32 %v1716, %v1412
        %v1718 = vadd.f32 %v1717, %v1416
        %v1719 = vadd.f32 %v1718, %v1420
        %v1720 = vadd.f32 %v1719, %v1424
        %v1721 = vadd.f32 %v1720, %v1428
        %v1722 = vadd.f32 %v1721, %v1432
        %v1723 = vrot.slane %v1722, 4
        %v1724 = vadd.f32 %v1722, %v1723
        %v1725 = vrot.slane %v1724, 2
        %v1726 = vadd.f32 %v1724, %v1725
        %v1727 = vrot.slane %v1726, 1
        %v1728 = vadd.f32 %v1726, %v1727
        %v1737 = vcombine.low %v1469, %v1506
        %v1738 = vcombine.low %v1543, %v1580
        %v1740 = vunpack.c.l.s4 1983009808
        %v1741 = vunpack.c.0.s8 %v1740
        %v1742 = vlaneseq
        %v1743 = vshrl.u32 %v1742, 7
        %v1744 = vsub.s32 %v1741, %v1743
        %v1745 = vrot.slane %v1737, %v1744
        %v1747 = vunpack.c.l.s4 1983009808
        %v1748 = vunpack.c.0.s8 %v1747
        %v1749 = vlaneseq
        %v1750 = vshrl.u32 %v1749, 7
        %v1751 = vsub.s32 %v1748, %v1750
        %v1752 = vrot.slane %v1738, %v1751
        %v1753 = vcombine.low %v1745, %v1752
        %v1754 = vcombine.low %v1617, %v1654
        %v1755 = vcombine.low %v1691, %v1728
        %v1757 = vunpack.c.l.s4 1983009808
        %v1758 = vunpack.c.0.s8 %v1757
        %v1759 = vlaneseq
        %v1760 = vshrl.u32 %v1759, 7
        %v1761 = vsub.s32 %v1758, %v1760
        %v1762 = vrot.slane %v1754, %v1761
        %v1764 = vunpack.c.l.s4 1983009808
        %v1765 = vunpack.c.0.s8 %v1764
        %v1766 = vlaneseq
        %v1767 = vshrl.u32 %v1766, 7
        %v1768 = vsub.s32 %v1765, %v1767
        %v1769 = vrot.slane %v1755, %v1768
        %v1770 = vcombine.low %v1762, %v1769
        %vm1771 = vcmask 1044484
        %v1772 = vsel %vm1771, %v1753, %v1753
        %vm1773 = vcmask 1046534
        %v1774 = vsel %vm1773, %v1753, %v1772
        %v1775 = vrot.slane %v1770, 7
        %vm1776 = vcmask 1041409
        %v1777 = vsel %vm1776, %v1775, %v1774
        %vm1778 = vcmask 1043459
        %v1779 = vsel %vm1778, %v1775, %v1777
        %vm1780 = vcmask 1045509
        %v1781 = vsel %vm1780, %v1775, %v1779
        %vm1782 = vcmask 1047559
        %v1783 = vsel %vm1782, %v1775, %v1781
        %v1785 = vadd.f32 %v856, %v1783
        %1786 = vst [vmem:[#allocation2] sm:$0xff] %v1785
        %v1787 = vld [vmem:[#allocation3] sm:$0x3]
        %vm1788 = vcmask 7168
        %v1789 = vsel %vm1788, %v536, 0.0
        %v1790 = vsel %vm1788, %v537, 0.0
        %v1791 = vadd.f32 %v1789, %v1790
        %v1792 = vsel %vm1788, %v538, 0.0
        %v1793 = vadd.f32 %v1791, %v1792
        %v1794 = vsel %vm1788, %v539, 0.0
        %v1795 = vadd.f32 %v1793, %v1794
        %v1796 = vsel %vm1788, %v540, 0.0
        %v1797 = vadd.f32 %v1795, %v1796
        %v1798 = vsel %vm1788, %v541, 0.0
        %v1799 = vadd.f32 %v1797, %v1798
        %v1800 = vsel %vm1788, %v542, 0.0
        %v1801 = vadd.f32 %v1799, %v1800
        %v1802 = vsel %vm1788, %v543, 0.0
        %v1803 = vadd.f32 %v1801, %v1802
        %v1804 = vsel %vm1788, %v544, 0.0
        %v1805 = vadd.f32 %v1803, %v1804
        %v1806 = vsel %vm1788, %v545, 0.0
        %v1807 = vadd.f32 %v1805, %v1806
        %v1808 = vsel %vm1788, %v546, 0.0
        %v1809 = vadd.f32 %v1807, %v1808
        %v1810 = vsel %vm1788, %v547, 0.0
        %v1811 = vadd.f32 %v1809, %v1810
        %v1812 = vsel %vm1788, %v548, 0.0
        %v1813 = vadd.f32 %v1811, %v1812
        %v1814 = vsel %vm1788, %v549, 0.0
        %v1815 = vadd.f32 %v1813, %v1814
        %v1816 = vsel %vm1788, %v550, 0.0
        %v1817 = vadd.f32 %v1815, %v1816
        %v1818 = vsel %vm1788, %v551, 0.0
        %v1819 = vadd.f32 %v1817, %v1818
        %v1820 = vsel %vm1788, %v552, 0.0
        %v1821 = vadd.f32 %v1819, %v1820
        %v1822 = vsel %vm1788, %v553, 0.0
        %v1823 = vadd.f32 %v1821, %v1822
        %v1824 = vsel %vm1788, %v554, 0.0
        %v1825 = vadd.f32 %v1823, %v1824
        %v1826 = vsel %vm1788, %v555, 0.0
        %v1827 = vadd.f32 %v1825, %v1826
        %v1828 = vsel %vm1788, %v556, 0.0
        %v1829 = vadd.f32 %v1827, %v1828
        %v1830 = vsel %vm1788, %v557, 0.0
        %v1831 = vadd.f32 %v1829, %v1830
        %v1832 = vsel %vm1788, %v558, 0.0
        %v1833 = vadd.f32 %v1831, %v1832
        %v1834 = vsel %vm1788, %v559, 0.0
        %v1835 = vadd.f32 %v1833, %v1834
        %v1836 = vsel %vm1788, %v560, 0.0
        %v1837 = vadd.f32 %v1835, %v1836
        %v1838 = vsel %vm1788, %v561, 0.0
        %v1839 = vadd.f32 %v1837, %v1838
        %v1840 = vsel %vm1788, %v562, 0.0
        %v1841 = vadd.f32 %v1839, %v1840
        %v1842 = vsel %vm1788, %v563, 0.0
        %v1843 = vadd.f32 %v1841, %v1842
        %v1844 = vsel %vm1788, %v564, 0.0
        %v1845 = vadd.f32 %v1843, %v1844
        %v1846 = vsel %vm1788, %v565, 0.0
        %v1847 = vadd.f32 %v1845, %v1846
        %v1848 = vsel %vm1788, %v566, 0.0
        %v1849 = vadd.f32 %v1847, %v1848
        %v1850 = vsel %vm1788, %v567, 0.0
        %v1851 = vadd.f32 %v1849, %v1850
        %v1852 = vrot.slane %v1851, 4
        %v1853 = vadd.f32 %v1851, %v1852
        %v1854 = vrot.slane %v1853, 2
        %v1855 = vadd.f32 %v1853, %v1854
        %v1856 = vrot.slane %v1855, 1
        %v1857 = vadd.f32 %v1855, %v1856
        %v1858 = vsel %vm1788, %v568, 0.0
        %v1859 = vsel %vm1788, %v569, 0.0
        %v1860 = vadd.f32 %v1858, %v1859
        %v1861 = vsel %vm1788, %v570, 0.0
        %v1862 = vadd.f32 %v1860, %v1861
        %v1863 = vsel %vm1788, %v571, 0.0
        %v1864 = vadd.f32 %v1862, %v1863
        %v1865 = vsel %vm1788, %v572, 0.0
        %v1866 = vadd.f32 %v1864, %v1865
        %v1867 = vsel %vm1788, %v573, 0.0
        %v1868 = vadd.f32 %v1866, %v1867
        %v1869 = vsel %vm1788, %v574, 0.0
        %v1870 = vadd.f32 %v1868, %v1869
        %v1871 = vsel %vm1788, %v575, 0.0
        %v1872 = vadd.f32 %v1870, %v1871
        %v1873 = vsel %vm1788, %v576, 0.0
        %v1874 = vadd.f32 %v1872, %v1873
        %v1875 = vsel %vm1788, %v577, 0.0
        %v1876 = vadd.f32 %v1874, %v1875
        %v1877 = vsel %vm1788, %v578, 0.0
        %v1878 = vadd.f32 %v1876, %v1877
        %v1879 = vsel %vm1788, %v579, 0.0
        %v1880 = vadd.f32 %v1878, %v1879
        %v1881 = vsel %vm1788, %v580, 0.0
        %v1882 = vadd.f32 %v1880, %v1881
        %v1883 = vsel %vm1788, %v581, 0.0
        %v1884 = vadd.f32 %v1882, %v1883
        %v1885 = vsel %vm1788, %v582, 0.0
        %v1886 = vadd.f32 %v1884, %v1885
        %v1887 = vsel %vm1788, %v583, 0.0
        %v1888 = vadd.f32 %v1886, %v1887
        %v1889 = vsel %vm1788, %v584, 0.0
        %v1890 = vadd.f32 %v1888, %v1889
        %v1891 = vsel %vm1788, %v585, 0.0
        %v1892 = vadd.f32 %v1890, %v1891
        %v1893 = vsel %vm1788, %v586, 0.0
        %v1894 = vadd.f32 %v1892, %v1893
        %v1895 = vsel %vm1788, %v587, 0.0
        %v1896 = vadd.f32 %v1894, %v1895
        %v1897 = vsel %vm1788, %v588, 0.0
        %v1898 = vadd.f32 %v1896, %v1897
        %v1899 = vsel %vm1788, %v589, 0.0
        %v1900 = vadd.f32 %v1898, %v1899
        %v1901 = vsel %vm1788, %v590, 0.0
        %v1902 = vadd.f32 %v1900, %v1901
        %v1903 = vsel %vm1788, %v591, 0.0
        %v1904 = vadd.f32 %v1902, %v1903
        %v1905 = vsel %vm1788, %v592, 0.0
        %v1906 = vadd.f32 %v1904, %v1905
        %v1907 = vsel %vm1788, %v593, 0.0
        %v1908 = vadd.f32 %v1906, %v1907
        %v1909 = vsel %vm1788, %v594, 0.0
        %v1910 = vadd.f32 %v1908, %v1909
        %v1911 = vsel %vm1788, %v595, 0.0
        %v1912 = vadd.f32 %v1910, %v1911
        %v1913 = vsel %vm1788, %v596, 0.0
        %v1914 = vadd.f32 %v1912, %v1913
        %v1915 = vsel %vm1788, %v597, 0.0
        %v1916 = vadd.f32 %v1914, %v1915
        %v1917 = vsel %vm1788, %v598, 0.0
        %v1918 = vadd.f32 %v1916, %v1917
        %v1919 = vsel %vm1788, %v599, 0.0
        %v1920 = vadd.f32 %v1918, %v1919
        %v1921 = vrot.slane %v1920, 4
        %v1922 = vadd.f32 %v1920, %v1921
        %v1923 = vrot.slane %v1922, 2
        %v1924 = vadd.f32 %v1922, %v1923
        %v1925 = vrot.slane %v1924, 1
        %v1926 = vadd.f32 %v1924, %v1925
        %v1929 = vsel %vm1776, %v1926, %v1857
        %v1931 = vadd.f32 %v1787, %v1929
        %vm1932 = vcmask 1024
        %1933 = vst.msk [vmem:[#allocation3] sm:$0x3] %vm1932, %v1931
        %p1934 = scmp.eq.s32.totalorder %s24, 3
        // Predicated region
        $region75: #{tpu_custom_call.1} parent=61 // pred_check
          %p1935 = pneg %p1934
        $region76: #{tpu_custom_call.1} parent=61 // pred_check_branch
          %1937 = sbr.rel (%p1935) target = $region78
        $region77: #{tpu_custom_call.1} parent=61 // pred_region
          %v1938 = vld [vmem:[#allocation3] sm:$0x3]
          %v1939 = vmax.f32 %v1938, 1.0
          %v1940 = vrcp.pop %v1939
          %v1941 = vld [vmem:[#allocation2] sm:$0xff]
          %1943 = vset.pattern.permute.xlu0 0
          %1944 = vperm.xlu0 %1943, %v1940
          %v1945 = vpop.permute.xlu0 %1944
          %v1947 = vunpack.c.l.s4 269488144
          %v1948 = vunpack.c.0.s8 %v1947
          %v1949 = vlaneseq
          %v1950 = vshrl.u32 %v1949, 7
          %v1951 = vsub.s32 %v1948, %v1950
          %v1952 = vrot.slane %v1945, %v1951
          %v1954 = vmul.f32 %v1941, %v1952
          %1955 = vst [vmem:[#allocation8] sm:$0xff] %v1954
        $region78: #{tpu_custom_call.1} parent=61 // pred_fallthru
          _
        // Predicated region
        $region79: #{tpu_custom_call.1} parent=61 // pred_check
          %p1956 = pneg %p114
        $region80: #{tpu_custom_call.1} parent=61 // pred_check_branch
          %1958 = sbr.rel (%p1956) target = $region82
        $region81: #{tpu_custom_call.1} parent=61 // pred_region
          %s1959 = smul.u32 4, %s23
          %s1961 = ssub.s32 128, 128
          %1962 = vsyncadd [#allocation7], %s1961
          %s1963 = smul.addr %s22, 4
          %s1964 = sadd.s32 %s1959, %s1963
          %s1965 = smul.addr %s1964, 32
          %s1966 = scalar_lea.hbm %s2, %s1965
          %s1968 = sshll.u32 [#allocation8], 4
          %s1969 = int_to_ptr.vmem [resolvable:$true] %s1968
          %1971 = dma.vmem_to_hbm [thread:$0]  %s1969, 128, %s1966, [#allocation7]
        $region82: #{tpu_custom_call.1} parent=61 // pred_fallthru
          _
        // Predicated region
        $region83: #{tpu_custom_call.1} parent=61 // pred_check
          %p1972 = pneg %p114
        $region84: #{tpu_custom_call.1} parent=61 // pred_check_branch
          %1974 = sbr.rel (%p1972) target = $region86
        $region85: #{tpu_custom_call.1} parent=61 // pred_region
          %1975 = dma.done [#allocation7], 128
        $region86: #{tpu_custom_call.1} parent=61 // pred_fallthru
          _
      $region62: #{tpu_custom_call.1} parent=5 // pred_fallthru
        _
      %p1976 = scmp.le.s32.totalorder 2, %s12
      // Predicated region
      $region87: #{tpu_custom_call.1} parent=5 // pred_check
        %p1977 = pneg %p1976
      $region88: #{tpu_custom_call.1} parent=5 // pred_check_branch
        %1979 = sbr.rel (%p1977) target = $region90
      $region89: #{tpu_custom_call.1} parent=5 // pred_region
        %s1980 = ssub.s32 %s12, 2
      $region90: #{tpu_custom_call.1} parent=5 // pred_fallthru
        _
    $region6: #{tpu_custom_call.1} parent=1 // loop_footer
      %s16 = sadd.s32 1, %s12
    $region7: #{tpu_custom_call.1} parent=1 // loop_footer_branch
      %11 = sbr.rel target = $region3
    $region8: #{tpu_custom_call.1} parent=1 // loop_exit
      _
    %1981 = vsyncpa [#allocation6], 1
    %s1982 = scalar_lea.sflag [#allocation6], 1
    %1983 = vsyncpa %s1982, 1
    %1984 = vsyncpa [#allocation7], 1
    %s1985 = scalar_lea.sflag [#allocation7], 1
    %1986 = vsyncpa %s1985, 1

</llo_original>
